<compile_context>
chip_gen: v6e
topology: v6e:2x2x1
jax: 0.10.0
libtpu: 0.0.40
codegen_flags: <defaults>
</compile_context>

<pallas_src>
import math
import numpy as np
import jax
import jax.numpy as jnp
from jax.experimental import pallas as pl
from jax.experimental.pallas import tpu as pltpu

NEG_SLOPE = 0.01        # nn.LeakyReLU default negative_slope
NEG_MASK = -3.0e38      # effectively -inf for masking padded columns before top_k
LANE = 128              # vreg lane width  (last-dim padding target)
SUB = 8                 # vreg sublane count


def _round_up(x, m):
    return ((x + m - 1) // m) * m


def _leaky_relu(x):
    return jnp.where(x >= 0, x, NEG_SLOPE * x)


# ----------------------------- Pallas kernels ------------------------------

def similarity_kernel(sel_ref, feat_ref, mask_ref, sim_ref):
    # similarity_vec = one_hot(rows) @ batch_trans_features   (gather as matmul)
    v = jnp.dot(sel_ref[...], feat_ref[...], preferred_element_type=jnp.float32)
    # similarity_matrix = V @ V.T - eye  (exact reference semantics on the diagonal)
    sim = jax.lax.dot_general(v, v, (((1,), (1,)), ((), ())),
                              preferred_element_type=jnp.float32)
    n = sim.shape[0]
    r = jax.lax.broadcasted_iota(jnp.int32, (n, n), 0)
    c = jax.lax.broadcasted_iota(jnp.int32, (n, n), 1)
    sim = jnp.where(r == c, sim - 1.0, sim)
    # additive mask hides zero-padded columns from the host-side top_k
    sim_ref[...] = sim + mask_ref[...]


def fused_relation_kernel(h_ref, embsel_ref, emb_ref, fcw_ref, fcb_ref,
                          outsel_ref, w_ref, out_ref):
    """G-from-H + HGNN_conv + hedge_agg + v_agg + final leaky_relu(x @ weight),
    all fused; intermediates (G, X, hedge, VX) never leave VMEM."""
    H = h_ref[...]

    # degrees computed once, reused by both G and the hyper-aggregation.
    dv = jnp.sum(H, axis=1, keepdims=True)            # [NV, 1]
    de = jnp.sum(H, axis=0, keepdims=True)            # [1, NE]
    dv_safe = jnp.maximum(dv, 1.0)                    # clamp padded rows/cols
    de_safe = jnp.maximum(de, 1.0)
    inv_de = pl.reciprocal(de_safe, approx=True)      # EUP
    inv_dv = pl.reciprocal(dv_safe, approx=True)      # EUP
    dv2 = jax.lax.rsqrt(dv_safe)                      # DV^-0.5, EUP

    # generate_G_from_H: G = DV^-1/2 H W invDE H^T DV^-1/2  (W = identity)
    a = (dv2 * H) * inv_de
    b = dv2 * H
    G = jax.lax.dot_general(a, b, (((1,), (1,)), ((), ())),
                            preferred_element_type=jnp.float32)

    # embedding-table gather expressed as an exact one-hot matmul
    x0 = jnp.dot(embsel_ref[...], emb_ref[...], preferred_element_type=jnp.float32)

    # HGNN_conv.forward: x = LeakyReLU(fc(x)); x = G @ x
    hfc = _leaky_relu(jnp.dot(x0, fcw_ref[...],
                              preferred_element_type=jnp.float32) + fcb_ref[...])
    X = jnp.dot(G, hfc, preferred_element_type=jnp.float32)
    # TODO(synk): nn.Dropout(p=0.3) is stochastic; eval-mode identity used here.

    # hedge_agg: (H^T / DE) @ X ; v_agg: (H / DV) @ hedge   (de/dv reused from above)
    hedge = jax.lax.dot_general(H * inv_de, X, (((0,), (0,)), ((), ())),
                                preferred_element_type=jnp.float32)
    vx = jnp.dot(H * inv_dv, hedge, preferred_element_type=jnp.float32)

    # batch-row selection (one-hot matmul) + nodes_embed = leaky_relu(sel @ weight)
    sel = jnp.dot(outsel_ref[...], vx, preferred_element_type=jnp.float32)
    out_ref[...] = _leaky_relu(jnp.dot(sel, w_ref[...],
                                       preferred_element_type=jnp.float32))
    # TODO(synk): at realistic graph sizes (n_v in the thousands) switch to a tiled
    # grid (BlockSpec over n_v tiles, reduction axis last, "parallel" semantics for
    # v7x's two TensorCores, explicit vmem_limit_bytes) instead of single-block VMEM.


# ------------------------- jitted device sections ---------------------------

@jax.jit
def _similarity_topk(sim_sel, feats, col_mask):
    u_pad = sim_sel.shape[0]
    sim = pl.pallas_call(
        similarity_kernel,
        out_shape=jax.ShapeDtypeStruct((u_pad, u_pad), jnp.float32),
        in_specs=[pl.BlockSpec(memory_space=pltpu.MemorySpace.VMEM)] * 3,
        out_specs=pl.BlockSpec(memory_space=pltpu.MemorySpace.VMEM),
    )(sim_sel, feats, col_mask)
    _, idx = jax.lax.top_k(sim, 2)                    # glue: torch.topk(sim, 2)
    return idx


@jax.jit
def _fused_relation(H, emb_sel, out_sel, embedding, fc_w, fc_b, weight):
    b_pad = out_sel.shape[0]
    emb_pad = weight.shape[1]
    return pl.pallas_call(
        fused_relation_kernel,
        out_shape=jax.ShapeDtypeStruct((b_pad, emb_pad), jnp.float32),
        in_specs=[pl.BlockSpec(memory_space=pltpu.MemorySpace.VMEM)] * 7,
        out_specs=pl.BlockSpec(memory_space=pltpu.MemorySpace.VMEM),
    )(H, emb_sel, embedding, fc_w, fc_b, out_sel, weight)


# ----------------------------- parameters ----------------------------------

def xavier_uniform(key, shape):
    fan_in, fan_out = shape
    bound = math.sqrt(6.0 / (fan_in + fan_out))
    return jax.random.uniform(key, shape, jnp.float32, -bound, bound)


def _pad2(x, rows, cols):
    return jnp.zeros((rows, cols), x.dtype).at[: x.shape[0], : x.shape[1]].set(x)


def init_params(key, feat_dim, embed_dim, num_total_nodes):
    ks = jax.random.split(key, 6)
    lin_bound = 1.0 / math.sqrt(feat_dim)
    feat_pad = _round_up(feat_dim, LANE)
    emb_pad = _round_up(embed_dim, LANE)
    nt_pad = _round_up(num_total_nodes, LANE)

    weight = xavier_uniform(ks[2], (embed_dim, embed_dim))
    fc_w = xavier_uniform(ks[3], (feat_dim, embed_dim))
    fc_b = jax.random.uniform(ks[4], (1, embed_dim), jnp.float32, -lin_bound, lin_bound)
    embedding = jax.random.normal(ks[5], (num_total_nodes, feat_dim), jnp.float32)

    return {
        # parameters from SimilarityForRelation.__init__ (w_ho / w_he unused in forward)
        "w_ho": xavier_uniform(ks[0], (2 * embed_dim, 1)),
        "w_he": xavier_uniform(ks[1], (2 * embed_dim, 1)),
        # lane-dense zero-padded copies used by the kernels (padding is exact)
        "weight": _pad2(weight, emb_pad, emb_pad),
        "fc_w": _pad2(fc_w, feat_pad, emb_pad),
        "fc_b": _pad2(fc_b, 1, emb_pad),
        "embedding": _pad2(embedding, nt_pad, feat_pad),
        "dims": (feat_dim, embed_dim, num_total_nodes),
    }


# ------------------------------- forward -----------------------------------

def similarity_for_relation_forward(params, nodes, to_neigh, id_mapping,
                                    batch_trans_features_pad):
    feat_dim, embed_dim, num_total_nodes = params["dims"]
    nt_pad = params["embedding"].shape[0]

    # --- similarity-based top-2 neighbor augmentation ---
    unique_nodes_list = sorted(set.union(set.union(*map(set, to_neigh)), set(nodes)))
    u = len(unique_nodes_list)
    u_pad = _round_up(u, LANE)
    rows = np.asarray([id_mapping[n] for n in unique_nodes_list], np.int32)

    sim_sel = np.zeros((u_pad, nt_pad), np.float32)   # one-hot row gather
    sim_sel[np.arange(u), rows] = 1.0
    col_mask = np.zeros((1, u_pad), np.float32)
    col_mask[0, u:] = NEG_MASK                        # never select padded columns

    topk_idx = np.asarray(_similarity_topk(jnp.asarray(sim_sel),
                                           batch_trans_features_pad,
                                           jnp.asarray(col_mask)))

    nodes2id = {n: i for i, n in enumerate(unique_nodes_list)}
    id2nodes = {i: n for i, n in enumerate(unique_nodes_list)}
    samp_neighs = []
    for i, neigh in enumerate(to_neigh):
        idx = topk_idx[nodes2id[nodes[i]]]
        samp_neighs.append(sorted(set(neigh)
                                  | {id2nodes[int(idx[0])], id2nodes[int(idx[1])]}
                                  | {nodes[i]}))

    # --- construct_G incidence + lane-dense operands for the fused kernel ---
    all_nodes = sorted({tok for st in samp_neighs for tok in st})
    unique_nodes = {n: i for i, n in enumerate(all_nodes)}
    n_v, n_e, b = len(all_nodes), len(samp_neighs), len(nodes)
    nv_pad = _round_up(n_v, LANE)
    ne_pad = _round_up(n_e, LANE)
    b_pad = _round_up(b, SUB)

    H = np.zeros((nv_pad, ne_pad), np.float32)
    for j, neigh in enumerate(samp_neighs):
        for n in neigh:
            H[unique_nodes[n], j] = 1.0

    emb_sel = np.zeros((nv_pad, nt_pad), np.float32)  # embedding-table gather
    emb_sel[np.arange(n_v), np.asarray(all_nodes, np.int32)] = 1.0
    out_sel = np.zeros((b_pad, nv_pad), np.float32)   # batch-row gather from VX
    out_sel[np.arange(b), np.asarray([unique_nodes[n] for n in nodes], np.int32)] = 1.0

    out_pad = _fused_relation(jnp.asarray(H), jnp.asarray(emb_sel),
                              jnp.asarray(out_sel), params["embedding"],
                              params["fc_w"], params["fc_b"], params["weight"])
    return out_pad[:b, :embed_dim]


# --------------------------------- main -------------------------------------

if __name__ == "__main__":
    master = jax.random.PRNGKey(0)
    k_params, k_feats = jax.random.split(master)

    feat_dim, embed_dim = 32, 32
    num_total_nodes = 20

    params = init_params(k_params, feat_dim, embed_dim, num_total_nodes)

    # synthetic graph batch
    nodes = [0, 1, 2, 3]
    to_neigh = [{1, 4, 5}, {0, 6, 7}, {8, 9}, {10, 11, 12}]
    id_mapping = {i: i for i in range(num_total_nodes)}
    btf = jax.random.normal(k_feats, (num_total_nodes, embed_dim), jnp.float32)
    btf_pad = _pad2(btf, _round_up(num_total_nodes, LANE), _round_up(embed_dim, LANE))

    out = similarity_for_relation_forward(params, nodes, to_neigh, id_mapping, btf_pad)
    jax.block_until_ready(out)
    assert out.shape == (len(nodes), embed_dim)
    assert bool(jnp.all(jnp.isfinite(out)))
    print("KERNEL_OK")
</pallas_src>

<mosaic_0001>
module attributes {stable_mosaic.version = 11 : i64} {
  func.func @similarity_kernel(%arg0: memref<128x128xf32, #tpu.memory_space<vmem>>, %arg1: memref<128x128xf32, #tpu.memory_space<vmem>>, %arg2: memref<1x128xf32, #tpu.memory_space<vmem>>, %arg3: memref<128x128xf32, #tpu.memory_space<vmem>>) attributes {dimension_semantics = [], scalar_prefetch = 0 : i64, scratch_operands = 0 : i64, tpu.core_type = #tpu.core_type<tc>} {
    %c0 = arith.constant 0 : index
    %c0_0 = arith.constant 0 : index
    %0 = vector.load %arg0[%c0, %c0_0] : memref<128x128xf32, #tpu.memory_space<vmem>>, vector<128x128xf32>
    %c0_1 = arith.constant 0 : index
    %c0_2 = arith.constant 0 : index
    %1 = vector.load %arg1[%c0_1, %c0_2] : memref<128x128xf32, #tpu.memory_space<vmem>>, vector<128x128xf32>
    %cst = arith.constant dense<0.000000e+00> : vector<128x128xf32>
    %2 = tpu.matmul %0, %1, %cst {dimension_numbers = #tpu.dot_dimension_numbers<[1], [0], [0], [1], [0, 0, 1, 1], [], []>} : vector<128x128xf32>, vector<128x128xf32>, vector<128x128xf32> -> vector<128x128xf32>
    %cst_3 = arith.constant dense<0.000000e+00> : vector<128x128xf32>
    %3 = tpu.matmul %2, %2, %cst_3 {dimension_numbers = #tpu.dot_dimension_numbers<[1], [1], [0], [0], [0, 0, 1, 0], [], []>} : vector<128x128xf32>, vector<128x128xf32>, vector<128x128xf32> -> vector<128x128xf32>
    %4 = tpu.iota {dimensions = array<i32: 0>} : vector<128x128xi32>
    %5 = tpu.iota {dimensions = array<i32: 1>} : vector<128x128xi32>
    %6 = arith.cmpi eq, %4, %5 : vector<128x128xi32>
    %cst_4 = arith.constant 1.000000e+00 : f32
    %7 = vector.broadcast %cst_4 : f32 to vector<128x128xf32>
    %8 = arith.subf %3, %7 : vector<128x128xf32>
    %9 = arith.select %6, %8, %3 : vector<128x128xi1>, vector<128x128xf32>
    %c0_5 = arith.constant 0 : index
    %c0_6 = arith.constant 0 : index
    %10 = vector.load %arg2[%c0_5, %c0_6] : memref<1x128xf32, #tpu.memory_space<vmem>>, vector<1x128xf32>
    %11 = vector.broadcast %10 : vector<1x128xf32> to vector<128x128xf32>
    %12 = arith.addf %9, %11 : vector<128x128xf32>
    %c0_7 = arith.constant 0 : index
    %c0_8 = arith.constant 0 : index
    %13 = vector.load %arg3[%c0_7, %c0_8] : memref<128x128xf32, #tpu.memory_space<vmem>>, vector<128x128xf32>
    tpu.vector_store %arg3[%c0_7, %c0_8], %12 {strides = array<i32>} : memref<128x128xf32, #tpu.memory_space<vmem>>, vector<128x128xf32>,
    return
  }
}

</mosaic_0001>

<llo_original>
// kernel: custom-call
$region0: #{custom-call}
  #allocation0 [shape = 'u32[8,128]{1,0}', space=vmem, size = 0x1000, scoped, tag = 'scratch']
  #allocation1 [shape = 'u32[8,128]{1,0}', space=vmem, size = 0x1000, scoped, tag = 'scratch']
  #allocation2 [shape = 'u32[8,128]{1,0}', space=vmem, size = 0x1000, scoped, tag = 'scratch']
  #allocation3 [shape = 'u32[8,128]{1,0}', space=vmem, size = 0x1000, scoped, tag = 'scratch']
  #allocation4 [shape = 'u32[8,128]{1,0}', space=vmem, size = 0x1000, scoped, tag = 'scratch']
  #allocation5 [shape = 'u32[8,128]{1,0}', space=vmem, size = 0x1000, scoped, tag = 'scratch']
  #allocation6 [shape = 'u32[8,128]{1,0}', space=vmem, size = 0x1000, scoped, tag = 'scratch']
  %s0 = inlined_call_operand.vmem [shape: f32[128,128], index: 0, kind: input, shape index: {}]
  %s1 = inlined_call_operand.hbm [shape: f32[128,2], index: 1, kind: output, shape index: {0}]
  %s2 = inlined_call_operand.vmem [shape: s32[128,2], index: 2, kind: output, shape index: {1}]
  %3 = xla_tuple %s1, %s2
  %4 = xla_tuple 2147483648, 2147483647
  $region1: #{custom-call} parent=0
    #allocation7 [shape = 'u8[8192]{0}', space=vmem, size = 0x2000, scoped, tag = 'operand span for operand 1']
    #allocation8 [shape = 's32[2]{0}', space=sflag, size = 0x8, scoped, tag = 'scoped memory for custom-call']
    #allocation9 [shape = 'u8[8192]{0}', space=vmem, size = 0x2000, scoped, tag = 'operand span for operand 2']
    %5 = vsyncpa [#allocation8], 0
    %s6 = scalar_lea.sflag [#allocation8], 1
    %7 = vsyncpa %s6, 0
    loop: start=0, step=1, limit=17
    $region2: #{custom-call} parent=1 // loop_pre_header
      _
    $region3: #{custom-call} parent=1 // loop_header
      %s9 = sphi 0, %s13
      %p10 = scmp.ge.s32.totalorder %s9, 17
      %s15 = sphi 0, %s25
      %s16 = sphi 0, %s21
      %s17 = sphi 0, %s15
      %s18 = sphi 0, %s16
    $region4: #{custom-call} parent=1 // loop_header_branch
      %12 = sbr.rel (%p10) target = $region8
    $region5: #{custom-call} parent=1 // loop_body
      %s14 = ssub.s32 %s9, 1
      %s19 = sadd.s32 1, %s16
      %p20 = scmp.ge.s32.totalorder %s19, 1
      %s21 = scalar_select %p20, 0, %s19
      %s22 = sadd.s32 1, %s15
      %s23 = scalar_select %p20, %s22, %s15
      %p24 = scmp.ge.s32.totalorder %s23, 16
      %s25 = scalar_select %p24, 0, %s23
      %p26 = scmp.lt.s32.totalorder %s9, 16
      // Predicated region
      $region9: #{custom-call} parent=5 // pred_check
        %p27 = pneg %p26
      $region10: #{custom-call} parent=5 // pred_check_branch
        %29 = sbr.rel (%p27) target = $region12
      $region11: #{custom-call} parent=5 // pred_region
        #allocation10 [shape = 'f32[2,8]{1,0:T(8,128)}', space=vmem, size = 0x1000, scoped, tag = 'scoped memory for custom-call']
        #allocation11 [shape = 'f32[2,8]{1,0:T(8,128)}', space=vmem, size = 0x1000, scoped, tag = 'scoped memory for custom-call']
        #allocation12 [shape = 's32[2,8]{1,0:T(8,128)}', space=vmem, size = 0x1000, scoped, tag = 'scoped memory for custom-call']
        #allocation13 [shape = 's32[2,8]{1,0:T(8,128)}', space=vmem, size = 0x1000, scoped, tag = 'scoped memory for custom-call']
        %s30 = sand.u32 %s9, 1
        %s31 = scalar_lea.sflag [#allocation8], %s30
        %s32 = sand.u32 %s9, 1
        %s33 = smul.addr %s32, 8
        %s34 = scalar_lea.vmem [#allocation7], %s33
        %s35 = sand.u32 %s9, 1
        %s36 = sand.u32 %s9, 1
        %s37 = smul.addr %s36, 8
        %s38 = scalar_lea.vmem [#allocation9], %s37
        %39 = xla_tuple %s34, %s38
        %40 = vst [vmem:[#allocation10] sm:$0xff] 2147483648
        %41 = vst [vmem:[#allocation12] sm:$0xff] 2147483647
        %42 = xla_tuple [#allocation10], [#allocation12]
        %43 = xla_tuple [#allocation11], [#allocation13]
        $region13: #{custom-call} parent=11
          #allocation14 [shape = 'u8[4096]{0}', space=vmem, size = 0x1000, scoped, tag = 'operand span for operand 0']
          #allocation15 [shape = 's32[1024]{0}', space=vmem, size = 0x1000, scoped, tag = 'scoped memory for custom-call']
          // Predicated region
          $region14: #{custom-call} parent=13 // pred_check
            _
          $region15: #{custom-call} parent=13 // pred_check_branch
            %45 = sbr.rel (0) target = $region17
          $region16: #{custom-call} parent=13 // pred_region
            %s46 = smul.addr %s15, 8
            %s47 = scalar_lea.vmem %s0, %s46
            // Predicated region
            $region18: #{custom-call} parent=16 // pred_check
              _
            $region19: #{custom-call} parent=16 // pred_check_branch
              %49 = sbr.rel (0) target = $region21
            $region20: #{custom-call} parent=16 // pred_region
              // Predicated region
              $region22: #{custom-call} parent=20 // pred_check
                _
              $region23: #{custom-call} parent=20 // pred_check_branch
                %51 = sbr.rel (0) target = $region25
              $region24: #{custom-call} parent=20 // pred_region
                // Predicated region
                $region37: #{custom-call} parent=24 // pred_check
                  _
                $region38: #{custom-call} parent=24 // pred_check_branch
                  %67 = sbr.rel (0) target = $region40
                $region39: #{custom-call} parent=24 // pred_region
                  loop: start=0, step=1, limit=1
                  $region41: #{custom-call} parent=39 // loop_pre_header
                    _
                  $region42: #{custom-call} parent=39 // loop_header
                    %s69 = sphi 0, %s73
                    %p70 = scmp.ge.s32.totalorder %s69, 1
                    %s74 = sphi %s47, %s47
                    %s75 = sphi [#allocation14], [#allocation14]
                  $region43: #{custom-call} parent=39 // loop_header_branch
                    %72 = sbr.rel (%p70) target = $region47
                  $region44: #{custom-call} parent=39 // loop_body
                    %v76 = vld [vmem:[%s74] sm:$0xff]
                    %77 = vst [vmem:[%s75] sm:$0xff] %v76
                  $region45: #{custom-call} parent=39 // loop_footer
                    %s73 = sadd.s32 1, %s69
                  $region46: #{custom-call} parent=39 // loop_footer_branch
                    %68 = sbr.rel target = $region42
                  $region47: #{custom-call} parent=39 // loop_exit
                    _
                $region40: #{custom-call} parent=24 // pred_fallthru
                  _
                // Predicated region
                $region48: #{custom-call} parent=24 // pred_check
                  _
                $region49: #{custom-call} parent=24 // pred_check_branch
                  %79 = sbr.rel target = $region51
                $region50: #{custom-call} parent=24 // pred_region
                  _
                $region51: #{custom-call} parent=24 // pred_fallthru
                  _
              $region25: #{custom-call} parent=20 // pred_fallthru
                _
              // Predicated region
              $region26: #{custom-call} parent=20 // pred_check
                _
              $region27: #{custom-call} parent=20 // pred_check_branch
                %53 = sbr.rel target = $region29
              $region28: #{custom-call} parent=20 // pred_region
                %s55 = ssub.s32 256, 1
                loop: start=0, step=1, limit=1
                $region30: #{custom-call} parent=28 // loop_pre_header
                  _
                $region31: #{custom-call} parent=28 // loop_header
                  %s57 = sphi 0, %s61
                  %p58 = scmp.ge.s32.totalorder %s57, 1
                  %s62 = sphi %s47, %s47
                  %s63 = sphi [#allocation14], [#allocation14]
                $region32: #{custom-call} parent=28 // loop_header_branch
                  %60 = sbr.rel (%p58) target = $region36
                $region33: #{custom-call} parent=28 // loop_body
                  %v64 = vld [vmem:[%s62] sm:%s55]
                  %65 = vst [vmem:[%s63] sm:%s55] %v64
                $region34: #{custom-call} parent=28 // loop_footer
                  %s61 = sadd.s32 1, %s57
                $region35: #{custom-call} parent=28 // loop_footer_branch
                  %56 = sbr.rel target = $region31
                $region36: #{custom-call} parent=28 // loop_exit
                  _
              $region29: #{custom-call} parent=20 // pred_fallthru
                _
            $region21: #{custom-call} parent=16 // pred_fallthru
              _
            %80 = vnop
          $region17: #{custom-call} parent=13 // pred_fallthru
            _
          // Predicated region
          $region52: #{custom-call} parent=13 // pred_check
            _
          $region53: #{custom-call} parent=13 // pred_check_branch
            %82 = sbr.rel (0) target = $region55
          $region54: #{custom-call} parent=13 // pred_region
            _
          $region55: #{custom-call} parent=13 // pred_fallthru
            _
          %v83 = vlaneseq
          %v84 = vand.u32 %v83, 127
          %v85 = vlaneseq
          %v86 = vshrl.u32 %v85, 7
          %v87 = vshrl.u32 %v86, 3
          %v88 = vand.u32 %v86, 7
          %v89 = vmul.u32 %v87, 128
          %v90 = vadd.s32 %v84, %v89
          %v92 = vld [vmem:[#allocation14] sm:$0xff]
          %vm93 = vcmp.lt.s32.totalorder %v92, 0
          %v94 = vsub.s32 2147483647, %v92
          %v95 = vsel %vm93, %v94, %v92
          %vm97 = vcmp.lt.s32.totalorder %v90, 128
          %v98 = vsel %vm97, %v95, 2147483648
          %99 = vst [vmem:[#allocation14] sm:$0xff] %v98
          %v100 = vlaneseq
          %v101 = vand.u32 %v100, 127
          %v102 = vlaneseq
          %v103 = vshrl.u32 %v102, 7
          %v104 = vshrl.u32 %v103, 3
          %v105 = vand.u32 %v103, 7
          %v106 = vmul.u32 %v104, 128
          %v107 = vadd.s32 %v101, %v106
          %110 = vst [vmem:[#allocation15] sm:$0xff] %v107
          %111 = xla_tuple [#allocation14], [#allocation15]
          %112 = vst [vmem:[#allocation11] sm:$0xff] 2147483648
          %113 = vst [vmem:[#allocation13] sm:$0xff] 2147483647
          %114 = xla_tuple [#allocation11], [#allocation13]
          loop: start=0, step=1, limit=2
          $region56: #{custom-call} parent=13 // loop_pre_header
            _
          $region57: #{custom-call} parent=13 // loop_header
            %s116 = sphi 0, %s120
            %p117 = scmp.ge.s32.totalorder %s116, 2
          $region58: #{custom-call} parent=13 // loop_header_branch
            %119 = sbr.rel (%p117) target = $region62
          $region59: #{custom-call} parent=13 // loop_body
            %v121 = vld [vmem:[#allocation14] sm:$0xff]
            %v122 = vld [vmem:[#allocation15] sm:$0xff]
            %123 = xla_tuple %v121, %v122
            %124 = vxpose.xlu0.b32.start [1/16] %v121, 128
            %125 = vxpose.xlu0.b32.cont [2/16] %v121, 128
            %126 = vxpose.xlu0.b32.cont [3/16] %v121, 128
            %127 = vxpose.xlu0.b32.cont [4/16] %v121, 128
            %128 = vxpose.xlu0.b32.cont [5/16] %v121, 128
            %129 = vxpose.xlu0.b32.cont [6/16] %v121, 128
            %130 = vxpose.xlu0.b32.cont [7/16] %v121, 128
            %131 = vxpose.xlu0.b32.cont [8/16] %v121, 128
            %132 = vxpose.xlu0.b32.cont [9/16] %v121, 128
            %133 = vxpose.xlu0.b32.cont [10/16] %v121, 128
            %134 = vxpose.xlu0.b32.cont [11/16] %v121, 128
            %135 = vxpose.xlu0.b32.cont [12/16] %v121, 128
            %136 = vxpose.xlu0.b32.cont [13/16] %v121, 128
            %137 = vxpose.xlu0.b32.cont [14/16] %v121, 128
            %138 = vxpose.xlu0.b32.cont [15/16] %v121, 128
            %139 = vxpose.xlu0.b32.end [16/16] %v121, 128
            %v140 = vpop.trf.xlu0
            %v141 = vpop.trf.xlu0
            %v142 = vpop.trf.xlu0
            %v143 = vpop.trf.xlu0
            %v144 = vpop.trf.xlu0
            %v145 = vpop.trf.xlu0
            %v146 = vpop.trf.xlu0
            %v147 = vpop.trf.xlu0
            %v148 = vpop.trf.xlu0
            %v149 = vpop.trf.xlu0
            %v150 = vpop.trf.xlu0
            %v151 = vpop.trf.xlu0
            %v152 = vpop.trf.xlu0
            %v153 = vpop.trf.xlu0
            %v154 = vpop.trf.xlu0
            %v155 = vpop.trf.xlu0
            %156 = vxpose.xlu0.b32.start [1/16] %v122, 128
            %157 = vxpose.xlu0.b32.cont [2/16] %v122, 128
            %158 = vxpose.xlu0.b32.cont [3/16] %v122, 128
            %159 = vxpose.xlu0.b32.cont [4/16] %v122, 128
            %160 = vxpose.xlu0.b32.cont [5/16] %v122, 128
            %161 = vxpose.xlu0.b32.cont [6/16] %v122, 128
            %162 = vxpose.xlu0.b32.cont [7/16] %v122, 128
            %163 = vxpose.xlu0.b32.cont [8/16] %v122, 128
            %164 = vxpose.xlu0.b32.cont [9/16] %v122, 128
            %165 = vxpose.xlu0.b32.cont [10/16] %v122, 128
            %166 = vxpose.xlu0.b32.cont [11/16] %v122, 128
            %167 = vxpose.xlu0.b32.cont [12/16] %v122, 128
            %168 = vxpose.xlu0.b32.cont [13/16] %v122, 128
            %169 = vxpose.xlu0.b32.cont [14/16] %v122, 128
            %170 = vxpose.xlu0.b32.cont [15/16] %v122, 128
            %171 = vxpose.xlu0.b32.end [16/16] %v122, 128
            %v172 = vpop.trf.xlu0
            %v173 = vpop.trf.xlu0
            %v174 = vpop.trf.xlu0
            %v175 = vpop.trf.xlu0
            %v176 = vpop.trf.xlu0
            %v177 = vpop.trf.xlu0
            %v178 = vpop.trf.xlu0
            %v179 = vpop.trf.xlu0
            %v180 = vpop.trf.xlu0
            %v181 = vpop.trf.xlu0
            %v182 = vpop.trf.xlu0
            %v183 = vpop.trf.xlu0
            %v184 = vpop.trf.xlu0
            %v185 = vpop.trf.xlu0
            %v186 = vpop.trf.xlu0
            %v187 = vpop.trf.xlu0
            %188 = xla_tuple %v140, %v172
            %189 = xla_tuple %v141, %v173
            %vm190 = vcmp.gt.s32.totalorder %v141, %v140
            %vm191 = vcmp.eq.s32.totalorder %v141, %v140
            %vm192 = vcmp.lt.s32.totalorder %v173, %v172
            %vm193 = vmand %vm191, %vm192
            %vm194 = vmor %vm190, %vm193
            %v195 = vsel %vm194, %v141, %v140
            %v196 = vsel %vm194, %v173, %v172
            %197 = xla_tuple %v195, %v196
            %198 = xla_tuple %v142, %v174
            %vm199 = vcmp.gt.s32.totalorder %v142, %v195
            %vm200 = vcmp.eq.s32.totalorder %v142, %v195
            %vm201 = vcmp.lt.s32.totalorder %v174, %v196
            %vm202 = vmand %vm200, %vm201
            %vm203 = vmor %vm199, %vm202
            %v204 = vsel %vm203, %v142, %v195
            %v205 = vsel %vm203, %v174, %v196
            %206 = xla_tuple %v204, %v205
            %207 = xla_tuple %v143, %v175
            %vm208 = vcmp.gt.s32.totalorder %v143, %v204
            %vm209 = vcmp.eq.s32.totalorder %v143, %v204
            %vm210 = vcmp.lt.s32.totalorder %v175, %v205
            %vm211 = vmand %vm209, %vm210
            %vm212 = vmor %vm208, %vm211
            %v213 = vsel %vm212, %v143, %v204
            %v214 = vsel %vm212, %v175, %v205
            %215 = xla_tuple %v213, %v214
            %216 = xla_tuple %v144, %v176
            %vm217 = vcmp.gt.s32.totalorder %v144, %v213
            %vm218 = vcmp.eq.s32.totalorder %v144, %v213
            %vm219 = vcmp.lt.s32.totalorder %v176, %v214
            %vm220 = vmand %vm218, %vm219
            %vm221 = vmor %vm217, %vm220
            %v222 = vsel %vm221, %v144, %v213
            %v223 = vsel %vm221, %v176, %v214
            %224 = xla_tuple %v222, %v223
            %225 = xla_tuple %v145, %v177
            %vm226 = vcmp.gt.s32.totalorder %v145, %v222
            %vm227 = vcmp.eq.s32.totalorder %v145, %v222
            %vm228 = vcmp.lt.s32.totalorder %v177, %v223
            %vm229 = vmand %vm227, %vm228
            %vm230 = vmor %vm226, %vm229
            %v231 = vsel %vm230, %v145, %v222
            %v232 = vsel %vm230, %v177, %v223
            %233 = xla_tuple %v231, %v232
            %234 = xla_tuple %v146, %v178
            %vm235 = vcmp.gt.s32.totalorder %v146, %v231
            %vm236 = vcmp.eq.s32.totalorder %v146, %v231
            %vm237 = vcmp.lt.s32.totalorder %v178, %v232
            %vm238 = vmand %vm236, %vm237
            %vm239 = vmor %vm235, %vm238
            %v240 = vsel %vm239, %v146, %v231
            %v241 = vsel %vm239, %v178, %v232
            %242 = xla_tuple %v240, %v241
            %243 = xla_tuple %v147, %v179
            %vm244 = vcmp.gt.s32.totalorder %v147, %v240
            %vm245 = vcmp.eq.s32.totalorder %v147, %v240
            %vm246 = vcmp.lt.s32.totalorder %v179, %v241
            %vm247 = vmand %vm245, %vm246
            %vm248 = vmor %vm244, %vm247
            %v249 = vsel %vm248, %v147, %v240
            %v250 = vsel %vm248, %v179, %v241
            %251 = xla_tuple %v249, %v250
            %252 = xla_tuple %v148, %v180
            %vm253 = vcmp.gt.s32.totalorder %v148, %v249
            %vm254 = vcmp.eq.s32.totalorder %v148, %v249
            %vm255 = vcmp.lt.s32.totalorder %v180, %v250
            %vm256 = vmand %vm254, %vm255
            %vm257 = vmor %vm253, %vm256
            %v258 = vsel %vm257, %v148, %v249
            %v259 = vsel %vm257, %v180, %v250
            %260 = xla_tuple %v258, %v259
            %261 = xla_tuple %v149, %v181
            %vm262 = vcmp.gt.s32.totalorder %v149, %v258
            %vm263 = vcmp.eq.s32.totalorder %v149, %v258
            %vm264 = vcmp.lt.s32.totalorder %v181, %v259
            %vm265 = vmand %vm263, %vm264
            %vm266 = vmor %vm262, %vm265
            %v267 = vsel %vm266, %v149, %v258
            %v268 = vsel %vm266, %v181, %v259
            %269 = xla_tuple %v267, %v268
            %270 = xla_tuple %v150, %v182
            %vm271 = vcmp.gt.s32.totalorder %v150, %v267
            %vm272 = vcmp.eq.s32.totalorder %v150, %v267
            %vm273 = vcmp.lt.s32.totalorder %v182, %v268
            %vm274 = vmand %vm272, %vm273
            %vm275 = vmor %vm271, %vm274
            %v276 = vsel %vm275, %v150, %v267
            %v277 = vsel %vm275, %v182, %v268
            %278 = xla_tuple %v276, %v277
            %279 = xla_tuple %v151, %v183
            %vm280 = vcmp.gt.s32.totalorder %v151, %v276
            %vm281 = vcmp.eq.s32.totalorder %v151, %v276
            %vm282 = vcmp.lt.s32.totalorder %v183, %v277
            %vm283 = vmand %vm281, %vm282
            %vm284 = vmor %vm280, %vm283
            %v285 = vsel %vm284, %v151, %v276
            %v286 = vsel %vm284, %v183, %v277
            %287 = xla_tuple %v285, %v286
            %288 = xla_tuple %v152, %v184
            %vm289 = vcmp.gt.s32.totalorder %v152, %v285
            %vm290 = vcmp.eq.s32.totalorder %v152, %v285
            %vm291 = vcmp.lt.s32.totalorder %v184, %v286
            %vm292 = vmand %vm290, %vm291
            %vm293 = vmor %vm289, %vm292
            %v294 = vsel %vm293, %v152, %v285
            %v295 = vsel %vm293, %v184, %v286
            %296 = xla_tuple %v294, %v295
            %297 = xla_tuple %v153, %v185
            %vm298 = vcmp.gt.s32.totalorder %v153, %v294
            %vm299 = vcmp.eq.s32.totalorder %v153, %v294
            %vm300 = vcmp.lt.s32.totalorder %v185, %v295
            %vm301 = vmand %vm299, %vm300
            %vm302 = vmor %vm298, %vm301
            %v303 = vsel %vm302, %v153, %v294
            %v304 = vsel %vm302, %v185, %v295
            %305 = xla_tuple %v303, %v304
            %306 = xla_tuple %v154, %v186
            %vm307 = vcmp.gt.s32.totalorder %v154, %v303
            %vm308 = vcmp.eq.s32.totalorder %v154, %v303
            %vm309 = vcmp.lt.s32.totalorder %v186, %v304
            %vm310 = vmand %vm308, %vm309
            %vm311 = vmor %vm307, %vm310
            %v312 = vsel %vm311, %v154, %v303
            %v313 = vsel %vm311, %v186, %v304
            %314 = xla_tuple %v312, %v313
            %315 = xla_tuple %v155, %v187
            %vm316 = vcmp.gt.s32.totalorder %v155, %v312
            %vm317 = vcmp.eq.s32.totalorder %v155, %v312
            %vm318 = vcmp.lt.s32.totalorder %v187, %v313
            %vm319 = vmand %vm317, %vm318
            %vm320 = vmor %vm316, %vm319
            %v321 = vsel %vm320, %v155, %v312
            %v322 = vsel %vm320, %v187, %v313
            %323 = xla_tuple %v321, %v322
            %v324 = vrot.slane %v321, 1
            %v325 = vrot.slane %v322, 1
            %326 = xla_tuple %v324, %v325
            %vm327 = vcmp.gt.s32.totalorder %v324, %v321
            %vm328 = vcmp.eq.s32.totalorder %v324, %v321
            %vm329 = vcmp.lt.s32.totalorder %v325, %v322
            %vm330 = vmand %vm328, %vm329
            %vm331 = vmor %vm327, %vm330
            %v332 = vsel %vm331, %v324, %v321
            %v333 = vsel %vm331, %v325, %v322
            %334 = xla_tuple %v332, %v333
            %v335 = vrot.slane %v332, 1
            %v336 = vrot.slane %v333, 1
            %337 = xla_tuple %v335, %v336
            %vm338 = vcmp.gt.s32.totalorder %v335, %v332
            %vm339 = vcmp.eq.s32.totalorder %v335, %v332
            %vm340 = vcmp.lt.s32.totalorder %v336, %v333
            %vm341 = vmand %vm339, %vm340
            %vm342 = vmor %vm338, %vm341
            %v343 = vsel %vm342, %v335, %v332
            %v344 = vsel %vm342, %v336, %v333
            %345 = xla_tuple %v343, %v344
            %v346 = vrot.slane %v343, 1
            %v347 = vrot.slane %v344, 1
            %348 = xla_tuple %v346, %v347
            %vm349 = vcmp.gt.s32.totalorder %v346, %v343
            %vm350 = vcmp.eq.s32.totalorder %v346, %v343
            %vm351 = vcmp.lt.s32.totalorder %v347, %v344
            %vm352 = vmand %vm350, %vm351
            %vm353 = vmor %vm349, %vm352
            %v354 = vsel %vm353, %v346, %v343
            %v355 = vsel %vm353, %v347, %v344
            %356 = xla_tuple %v354, %v355
            %v357 = vrot.slane %v354, 1
            %v358 = vrot.slane %v355, 1
            %359 = xla_tuple %v357, %v358
            %vm360 = vcmp.gt.s32.totalorder %v357, %v354
            %vm361 = vcmp.eq.s32.totalorder %v357, %v354
            %vm362 = vcmp.lt.s32.totalorder %v358, %v355
            %vm363 = vmand %vm361, %vm362
            %vm364 = vmor %vm360, %vm363
            %v365 = vsel %vm364, %v357, %v354
            %v366 = vsel %vm364, %v358, %v355
            %367 = xla_tuple %v365, %v366
            %v368 = vrot.slane %v365, 1
            %v369 = vrot.slane %v366, 1
            %370 = xla_tuple %v368, %v369
            %vm371 = vcmp.gt.s32.totalorder %v368, %v365
            %vm372 = vcmp.eq.s32.totalorder %v368, %v365
            %vm373 = vcmp.lt.s32.totalorder %v369, %v366
            %vm374 = vmand %vm372, %vm373
            %vm375 = vmor %vm371, %vm374
            %v376 = vsel %vm375, %v368, %v365
            %v377 = vsel %vm375, %v369, %v366
            %378 = xla_tuple %v376, %v377
            %v379 = vrot.slane %v376, 1
            %v380 = vrot.slane %v377, 1
            %381 = xla_tuple %v379, %v380
            %vm382 = vcmp.gt.s32.totalorder %v379, %v376
            %vm383 = vcmp.eq.s32.totalorder %v379, %v376
            %vm384 = vcmp.lt.s32.totalorder %v380, %v377
            %vm385 = vmand %vm383, %vm384
            %vm386 = vmor %vm382, %vm385
            %v387 = vsel %vm386, %v379, %v376
            %v388 = vsel %vm386, %v380, %v377
            %389 = xla_tuple %v387, %v388
            %v390 = vrot.slane %v387, 1
            %v391 = vrot.slane %v388, 1
            %392 = xla_tuple %v390, %v391
            %vm393 = vcmp.gt.s32.totalorder %v390, %v387
            %vm394 = vcmp.eq.s32.totalorder %v390, %v387
            %vm395 = vcmp.lt.s32.totalorder %v391, %v388
            %vm396 = vmand %vm394, %vm395
            %vm397 = vmor %vm393, %vm396
            %v398 = vsel %vm397, %v390, %v387
            %v399 = vsel %vm397, %v391, %v388
            %400 = xla_tuple %v398, %v399
            %s401 = scalar_lea.vmem [#allocation11], %s116
            %402 = vst [vmem:[%s401] sm:$0x1] %v398
            %s403 = scalar_lea.vmem [#allocation13], %s116
            %404 = vst [vmem:[%s403] sm:$0x1] %v399
            %405 = xla_tuple %402, %404
            %406 = vxpose.xlu0.b32.start [1/16] %v399, 128
            %407 = vxpose.xlu0.b32.cont [2/16] 0.0, 128
            %408 = vxpose.xlu0.b32.cont [3/16] 0.0, 128
            %409 = vxpose.xlu0.b32.cont [4/16] 0.0, 128
            %410 = vxpose.xlu0.b32.cont [5/16] 0.0, 128
            %411 = vxpose.xlu0.b32.cont [6/16] 0.0, 128
            %412 = vxpose.xlu0.b32.cont [7/16] 0.0, 128
            %413 = vxpose.xlu0.b32.cont [8/16] 0.0, 128
            %414 = vxpose.xlu0.b32.cont [9/16] 0.0, 128
            %415 = vxpose.xlu0.b32.cont [10/16] 0.0, 128
            %416 = vxpose.xlu0.b32.cont [11/16] 0.0, 128
            %417 = vxpose.xlu0.b32.cont [12/16] 0.0, 128
            %418 = vxpose.xlu0.b32.cont [13/16] 0.0, 128
            %419 = vxpose.xlu0.b32.cont [14/16] 0.0, 128
            %420 = vxpose.xlu0.b32.cont [15/16] 0.0, 128
            %421 = vxpose.xlu0.b32.end [16/16] 0.0, 128
            %v422 = vpop.trf.xlu0
            %v423 = vpop.trf.xlu0
            %v424 = vpop.trf.xlu0
            %v425 = vpop.trf.xlu0
            %v426 = vpop.trf.xlu0
            %v427 = vpop.trf.xlu0
            %v428 = vpop.trf.xlu0
            %v429 = vpop.trf.xlu0
            %v430 = vpop.trf.xlu0
            %v431 = vpop.trf.xlu0
            %v432 = vpop.trf.xlu0
            %v433 = vpop.trf.xlu0
            %v434 = vpop.trf.xlu0
            %v435 = vpop.trf.xlu0
            %v436 = vpop.trf.xlu0
            %v437 = vpop.trf.xlu0
            %s438 = vtos %v422
            %s439 = sshrl.u32 %s438, 7
            %p440 = scmp.lt.s32.totalorder %s438, 0
            %s441 = ssub.s32 0, %s438
            %s442 = scalar_select %p440, %s441, %s438
            %s443 = sand.u32 %s442, 127
            %s444 = ssub.s32 0, %s443
            %s445 = scalar_select %p440, %s444, %s443
            %s446 = sshrl.u32 %s445, 7
            %s447 = smul.u32 %s446, 1024
            %s448 = sand.u32 %s445, 127
            %s449 = sadd.s32 %s447, %s448
            %v450 = vlaneseq
            %v451 = vstv %s449
            %vm453 = vcmp.eq.s32.totalorder %v450, %v451
            %s454 = smul.addr %s439, 8
            %s455 = scalar_lea.vmem [#allocation14], %s454
            %456 = vst.msk [vmem:[%s455] sm:$0xff] %vm453, 2147483648
            %s457 = smul.addr %s439, 8
            %s458 = scalar_lea.vmem [#allocation15], %s457
            %459 = vst.msk [vmem:[%s458] sm:$0xff] %vm453, 2147483647
            %460 = xla_tuple %456, %459
            %v461 = vrot.slane %v422, 1
            %s462 = vtos %v461
            %s463 = sshrl.u32 %s462, 7
            %p464 = scmp.lt.s32.totalorder %s462, 0
            %s465 = ssub.s32 0, %s462
            %s466 = scalar_select %p464, %s465, %s462
            %s467 = sand.u32 %s466, 127
            %s468 = ssub.s32 0, %s467
            %s469 = scalar_select %p464, %s468, %s467
            %s470 = sshrl.u32 %s469, 7
            %s471 = smul.u32 %s470, 1024
            %s472 = sand.u32 %s469, 127
            %s473 = sadd.s32 %s471, %s472
            %v474 = vlaneseq
            %v475 = vstv %s473
            %v476 = vadd.s32 %v475, 128
            %vm477 = vcmp.eq.s32.totalorder %v474, %v476
            %s478 = smul.addr %s463, 8
            %s479 = scalar_lea.vmem [#allocation14], %s478
            %480 = vst.msk [vmem:[%s479] sm:$0xff] %vm477, 2147483648
            %s481 = smul.addr %s463, 8
            %s482 = scalar_lea.vmem [#allocation15], %s481
            %483 = vst.msk [vmem:[%s482] sm:$0xff] %vm477, 2147483647
            %484 = xla_tuple %480, %483
            %v485 = vrot.slane %v461, 1
            %s486 = vtos %v485
            %s487 = sshrl.u32 %s486, 7
            %p488 = scmp.lt.s32.totalorder %s486, 0
            %s489 = ssub.s32 0, %s486
            %s490 = scalar_select %p488, %s489, %s486
            %s491 = sand.u32 %s490, 127
            %s492 = ssub.s32 0, %s491
            %s493 = scalar_select %p488, %s492, %s491
            %s494 = sshrl.u32 %s493, 7
            %s495 = smul.u32 %s494, 1024
            %s496 = sand.u32 %s493, 127
            %s497 = sadd.s32 %s495, %s496
            %v498 = vlaneseq
            %v499 = vstv %s497
            %v500 = vadd.s32 %v499, 256
            %vm501 = vcmp.eq.s32.totalorder %v498, %v500
            %s502 = smul.addr %s487, 8
            %s503 = scalar_lea.vmem [#allocation14], %s502
            %504 = vst.msk [vmem:[%s503] sm:$0xff] %vm501, 2147483648
            %s505 = smul.addr %s487, 8
            %s506 = scalar_lea.vmem [#allocation15], %s505
            %507 = vst.msk [vmem:[%s506] sm:$0xff] %vm501, 2147483647
            %508 = xla_tuple %504, %507
            %v509 = vrot.slane %v485, 1
            %s510 = vtos %v509
            %s511 = sshrl.u32 %s510, 7
            %p512 = scmp.lt.s32.totalorder %s510, 0
            %s513 = ssub.s32 0, %s510
            %s514 = scalar_select %p512, %s513, %s510
            %s515 = sand.u32 %s514, 127
            %s516 = ssub.s32 0, %s515
            %s517 = scalar_select %p512, %s516, %s515
            %s518 = sshrl.u32 %s517, 7
            %s519 = smul.u32 %s518, 1024
            %s520 = sand.u32 %s517, 127
            %s521 = sadd.s32 %s519, %s520
            %v522 = vlaneseq
            %v523 = vstv %s521
            %v524 = vadd.s32 %v523, 384
            %vm525 = vcmp.eq.s32.totalorder %v522, %v524
            %s526 = smul.addr %s511, 8
            %s527 = scalar_lea.vmem [#allocation14], %s526
            %528 = vst.msk [vmem:[%s527] sm:$0xff] %vm525, 2147483648
            %s529 = smul.addr %s511, 8
            %s530 = scalar_lea.vmem [#allocation15], %s529
            %531 = vst.msk [vmem:[%s530] sm:$0xff] %vm525, 2147483647
            %532 = xla_tuple %528, %531
            %v533 = vrot.slane %v509, 1
            %s534 = vtos %v533
            %s535 = sshrl.u32 %s534, 7
            %p536 = scmp.lt.s32.totalorder %s534, 0
            %s537 = ssub.s32 0, %s534
            %s538 = scalar_select %p536, %s537, %s534
            %s539 = sand.u32 %s538, 127
            %s540 = ssub.s32 0, %s539
            %s541 = scalar_select %p536, %s540, %s539
            %s542 = sshrl.u32 %s541, 7
            %s543 = smul.u32 %s542, 1024
            %s544 = sand.u32 %s541, 127
            %s545 = sadd.s32 %s543, %s544
            %v546 = vlaneseq
            %v547 = vstv %s545
            %v548 = vadd.s32 %v547, 512
            %vm549 = vcmp.eq.s32.totalorder %v546, %v548
            %s550 = smul.addr %s535, 8
            %s551 = scalar_lea.vmem [#allocation14], %s550
            %552 = vst.msk [vmem:[%s551] sm:$0xff] %vm549, 2147483648
            %s553 = smul.addr %s535, 8
            %s554 = scalar_lea.vmem [#allocation15], %s553
            %555 = vst.msk [vmem:[%s554] sm:$0xff] %vm549, 2147483647
            %556 = xla_tuple %552, %555
            %v557 = vrot.slane %v533, 1
            %s558 = vtos %v557
            %s559 = sshrl.u32 %s558, 7
            %p560 = scmp.lt.s32.totalorder %s558, 0
            %s561 = ssub.s32 0, %s558
            %s562 = scalar_select %p560, %s561, %s558
            %s563 = sand.u32 %s562, 127
            %s564 = ssub.s32 0, %s563
            %s565 = scalar_select %p560, %s564, %s563
            %s566 = sshrl.u32 %s565, 7
            %s567 = smul.u32 %s566, 1024
            %s568 = sand.u32 %s565, 127
            %s569 = sadd.s32 %s567, %s568
            %v570 = vlaneseq
            %v571 = vstv %s569
            %v572 = vadd.s32 %v571, 640
            %vm573 = vcmp.eq.s32.totalorder %v570, %v572
            %s574 = smul.addr %s559, 8
            %s575 = scalar_lea.vmem [#allocation14], %s574
            %576 = vst.msk [vmem:[%s575] sm:$0xff] %vm573, 2147483648
            %s577 = smul.addr %s559, 8
            %s578 = scalar_lea.vmem [#allocation15], %s577
            %579 = vst.msk [vmem:[%s578] sm:$0xff] %vm573, 2147483647
            %580 = xla_tuple %576, %579
            %v581 = vrot.slane %v557, 1
            %s582 = vtos %v581
            %s583 = sshrl.u32 %s582, 7
            %p584 = scmp.lt.s32.totalorder %s582, 0
            %s585 = ssub.s32 0, %s582
            %s586 = scalar_select %p584, %s585, %s582
            %s587 = sand.u32 %s586, 127
            %s588 = ssub.s32 0, %s587
            %s589 = scalar_select %p584, %s588, %s587
            %s590 = sshrl.u32 %s589, 7
            %s591 = smul.u32 %s590, 1024
            %s592 = sand.u32 %s589, 127
            %s593 = sadd.s32 %s591, %s592
            %v594 = vlaneseq
            %v595 = vstv %s593
            %v596 = vadd.s32 %v595, 768
            %vm597 = vcmp.eq.s32.totalorder %v594, %v596
            %s598 = smul.addr %s583, 8
            %s599 = scalar_lea.vmem [#allocation14], %s598
            %600 = vst.msk [vmem:[%s599] sm:$0xff] %vm597, 2147483648
            %s601 = smul.addr %s583, 8
            %s602 = scalar_lea.vmem [#allocation15], %s601
            %603 = vst.msk [vmem:[%s602] sm:$0xff] %vm597, 2147483647
            %604 = xla_tuple %600, %603
            %v605 = vrot.slane %v581, 1
            %s606 = vtos %v605
            %s607 = sshrl.u32 %s606, 7
            %p608 = scmp.lt.s32.totalorder %s606, 0
            %s609 = ssub.s32 0, %s606
            %s610 = scalar_select %p608, %s609, %s606
            %s611 = sand.u32 %s610, 127
            %s612 = ssub.s32 0, %s611
            %s613 = scalar_select %p608, %s612, %s611
            %s614 = sshrl.u32 %s613, 7
            %s615 = smul.u32 %s614, 1024
            %s616 = sand.u32 %s613, 127
            %s617 = sadd.s32 %s615, %s616
            %v618 = vlaneseq
            %v619 = vstv %s617
            %v620 = vadd.s32 %v619, 896
            %vm621 = vcmp.eq.s32.totalorder %v618, %v620
            %s622 = smul.addr %s607, 8
            %s623 = scalar_lea.vmem [#allocation14], %s622
            %624 = vst.msk [vmem:[%s623] sm:$0xff] %vm621, 2147483648
            %s625 = smul.addr %s607, 8
            %s626 = scalar_lea.vmem [#allocation15], %s625
            %627 = vst.msk [vmem:[%s626] sm:$0xff] %vm621, 2147483647
            %628 = xla_tuple %624, %627
            %v629 = vrot.slane %v605, 1
          $region60: #{custom-call} parent=13 // loop_footer
            %s120 = sadd.s32 1, %s116
          $region61: #{custom-call} parent=13 // loop_footer_branch
            %115 = sbr.rel target = $region57
          $region62: #{custom-call} parent=13 // loop_exit
            _
          %s630 = scalar_lea.vmem [#allocation11], 7
          %v631 = vld [vmem:[%s630] ss:$-1 sm:$0xff]
          %s632 = scalar_lea.vmem [#allocation11], 7
          %v633 = vld [vmem:[%s632] ss:$-1 sm:$0xff]
          %634 = vst [vmem:[#allocation11] sm:$0xff] %v633
          %635 = vst [vmem:[#allocation11] sm:$0xff] %v631
          %s636 = scalar_lea.vmem [#allocation13], 7
          %v637 = vld [vmem:[%s636] ss:$-1 sm:$0xff]
          %s638 = scalar_lea.vmem [#allocation13], 7
          %v639 = vld [vmem:[%s638] ss:$-1 sm:$0xff]
          %640 = vst [vmem:[#allocation13] sm:$0xff] %v639
          %641 = vst [vmem:[#allocation13] sm:$0xff] %v637
          %642 = xla_tuple %635, %641
          %v643 = vld [vmem:[#allocation10] sm:$0xff]
          %v644 = vld [vmem:[#allocation12] sm:$0xff]
          %645 = xla_tuple %v643, %v644
          %v646 = vld [vmem:[#allocation11] sm:$0xff]
          %v647 = vld [vmem:[#allocation13] sm:$0xff]
          %648 = xla_tuple %v646, %v647
          %vm649 = vcmp.gt.s32.totalorder %v643, %v646
          %vm650 = vcmp.eq.s32.totalorder %v643, %v646
          %vm651 = vcmp.lt.s32.totalorder %v644, %v647
          %vm652 = vmand %vm650, %vm651
          %vm653 = vmor %vm649, %vm652
          %v654 = vsel %vm653, %v643, %v646
          %655 = vst [vmem:[#allocation10] sm:$0xff] %v654
          %v656 = vsel %vm653, %v646, %v643
          %657 = vst [vmem:[#allocation11] sm:$0xff] %v656
          %v658 = vsel %vm653, %v644, %v647
          %659 = vst [vmem:[#allocation12] sm:$0xff] %v658
          %v660 = vsel %vm653, %v647, %v644
          %661 = vst [vmem:[#allocation13] sm:$0xff] %v660
          %662 = xla_tuple %657, %661
          %663 = xla_tuple [#allocation10], [#allocation12]
          %v664 = vld [vmem:[#allocation10] sm:$0xff]
          %v665 = vld [vmem:[#allocation12] sm:$0xff]
          %666 = xla_tuple %v664, %v665
          %v668 = vunpack.c.l.s4 839939668
          %v669 = vunpack.c.0.s8 %v668
          %v670 = vlaneseq
          %v671 = vshrl.u32 %v670, 7
          %v672 = vsub.s32 %v669, %v671
          %v673 = vrot.slane %v664, %v672
          %v675 = vunpack.c.l.s4 839939668
          %v676 = vunpack.c.0.s8 %v675
          %v677 = vlaneseq
          %v678 = vshrl.u32 %v677, 7
          %v679 = vsub.s32 %v676, %v678
          %v680 = vrot.slane %v665, %v679
          %681 = xla_tuple %v673, %v680
          %vm682 = vcmp.gt.s32.totalorder %v664, %v673
          %vm683 = vcmp.eq.s32.totalorder %v664, %v673
          %vm684 = vcmp.lt.s32.totalorder %v665, %v680
          %vm685 = vmand %vm683, %vm684
          %vm686 = vmor %vm682, %vm685
          %v687 = vlaneseq
          %v688 = vshrl.u32 %v687, 7
          %v689 = vand.u32 %v688, 4
          %vm690 = vcmp.ne.s32.totalorder %v689, 0
          %vm691 = vmxor %vm686, %vm690
          %v692 = vsel %vm691, %v664, %v673
          %v693 = vsel %vm691, %v665, %v680
          %694 = xla_tuple %v692, %v693
          %v696 = vunpack.c.l.s4 1417023538
          %v697 = vunpack.c.0.s8 %v696
          %v698 = vlaneseq
          %v699 = vshrl.u32 %v698, 7
          %v700 = vsub.s32 %v697, %v699
          %v701 = vrot.slane %v692, %v700
          %v703 = vunpack.c.l.s4 1417023538
          %v704 = vunpack.c.0.s8 %v703
          %v705 = vlaneseq
          %v706 = vshrl.u32 %v705, 7
          %v707 = vsub.s32 %v704, %v706
          %v708 = vrot.slane %v693, %v707
          %709 = xla_tuple %v701, %v708
          %vm710 = vcmp.gt.s32.totalorder %v692, %v701
          %vm711 = vcmp.eq.s32.totalorder %v692, %v701
          %vm712 = vcmp.lt.s32.totalorder %v693, %v708
          %vm713 = vmand %vm711, %vm712
          %vm714 = vmor %vm710, %vm713
          %v715 = vlaneseq
          %v716 = vshrl.u32 %v715, 7
          %v717 = vand.u32 %v716, 2
          %vm718 = vcmp.ne.s32.totalorder %v717, 0
          %vm719 = vmxor %vm714, %vm718
          %v720 = vsel %vm719, %v692, %v701
          %v721 = vsel %vm719, %v693, %v708
          %722 = xla_tuple %v720, %v721
          %v724 = vunpack.c.l.s4 1732584193
          %v725 = vunpack.c.0.s8 %v724
          %v726 = vlaneseq
          %v727 = vshrl.u32 %v726, 7
          %v728 = vsub.s32 %v725, %v727
          %v729 = vrot.slane %v720, %v728
          %v731 = vunpack.c.l.s4 1732584193
          %v732 = vunpack.c.0.s8 %v731
          %v733 = vlaneseq
          %v734 = vshrl.u32 %v733, 7
          %v735 = vsub.s32 %v732, %v734
          %v736 = vrot.slane %v721, %v735
          %737 = xla_tuple %v729, %v736
          %vm738 = vcmp.gt.s32.totalorder %v720, %v729
          %vm739 = vcmp.eq.s32.totalorder %v720, %v729
          %vm740 = vcmp.lt.s32.totalorder %v721, %v736
          %vm741 = vmand %vm739, %vm740
          %vm742 = vmor %vm738, %vm741
          %v743 = vlaneseq
          %v744 = vshrl.u32 %v743, 7
          %v745 = vand.u32 %v744, 1
          %vm746 = vcmp.ne.s32.totalorder %v745, 0
          %vm747 = vmxor %vm742, %vm746
          %v748 = vsel %vm747, %v720, %v729
          %v749 = vsel %vm747, %v721, %v736
          %750 = xla_tuple %v748, %v749
          %751 = vst [vmem:[#allocation10] sm:$0xff] %v748
          %752 = vst [vmem:[#allocation12] sm:$0xff] %v749
          %753 = xla_tuple %751, %752
          %v754 = vld [vmem:[#allocation10] sm:$0xff]
          %v755 = vld [vmem:[#allocation12] sm:$0xff]
          %756 = xla_tuple %v754, %v755
          %v758 = vunpack.c.l.s4 839939668
          %v759 = vunpack.c.0.s8 %v758
          %v760 = vlaneseq
          %v761 = vshrl.u32 %v760, 7
          %v762 = vsub.s32 %v759, %v761
          %v763 = vrot.slane %v754, %v762
          %v765 = vunpack.c.l.s4 839939668
          %v766 = vunpack.c.0.s8 %v765
          %v767 = vlaneseq
          %v768 = vshrl.u32 %v767, 7
          %v769 = vsub.s32 %v766, %v768
          %v770 = vrot.slane %v755, %v769
          %771 = xla_tuple %v763, %v770
          %vm772 = vcmp.gt.s32.totalorder %v754, %v763
          %vm773 = vcmp.eq.s32.totalorder %v754, %v763
          %vm774 = vcmp.lt.s32.totalorder %v755, %v770
          %vm775 = vmand %vm773, %vm774
          %vm776 = vmor %vm772, %vm775
          %v777 = vlaneseq
          %v778 = vshrl.u32 %v777, 7
          %v779 = vand.u32 %v778, 4
          %vm780 = vcmp.ne.s32.totalorder %v779, 0
          %vm781 = vmxor %vm776, %vm780
          %v782 = vsel %vm781, %v754, %v763
          %v783 = vsel %vm781, %v755, %v770
          %784 = xla_tuple %v782, %v783
          %v786 = vunpack.c.l.s4 1417023538
          %v787 = vunpack.c.0.s8 %v786
          %v788 = vlaneseq
          %v789 = vshrl.u32 %v788, 7
          %v790 = vsub.s32 %v787, %v789
          %v791 = vrot.slane %v782, %v790
          %v793 = vunpack.c.l.s4 1417023538
          %v794 = vunpack.c.0.s8 %v793
          %v795 = vlaneseq
          %v796 = vshrl.u32 %v795, 7
          %v797 = vsub.s32 %v794, %v796
          %v798 = vrot.slane %v783, %v797
          %799 = xla_tuple %v791, %v798
          %vm800 = vcmp.gt.s32.totalorder %v782, %v791
          %vm801 = vcmp.eq.s32.totalorder %v782, %v791
          %vm802 = vcmp.lt.s32.totalorder %v783, %v798
          %vm803 = vmand %vm801, %vm802
          %vm804 = vmor %vm800, %vm803
          %v805 = vlaneseq
          %v806 = vshrl.u32 %v805, 7
          %v807 = vand.u32 %v806, 2
          %vm808 = vcmp.ne.s32.totalorder %v807, 0
          %vm809 = vmxor %vm804, %vm808
          %v810 = vsel %vm809, %v782, %v791
          %v811 = vsel %vm809, %v783, %v798
          %812 = xla_tuple %v810, %v811
          %v814 = vunpack.c.l.s4 1732584193
          %v815 = vunpack.c.0.s8 %v814
          %v816 = vlaneseq
          %v817 = vshrl.u32 %v816, 7
          %v818 = vsub.s32 %v815, %v817
          %v819 = vrot.slane %v810, %v818
          %v821 = vunpack.c.l.s4 1732584193
          %v822 = vunpack.c.0.s8 %v821
          %v823 = vlaneseq
          %v824 = vshrl.u32 %v823, 7
          %v825 = vsub.s32 %v822, %v824
          %v826 = vrot.slane %v811, %v825
          %827 = xla_tuple %v819, %v826
          %vm828 = vcmp.gt.s32.totalorder %v810, %v819
          %vm829 = vcmp.eq.s32.totalorder %v810, %v819
          %vm830 = vcmp.lt.s32.totalorder %v811, %v826
          %vm831 = vmand %vm829, %vm830
          %vm832 = vmor %vm828, %vm831
          %v833 = vlaneseq
          %v834 = vshrl.u32 %v833, 7
          %v835 = vand.u32 %v834, 1
          %vm836 = vcmp.ne.s32.totalorder %v835, 0
          %vm837 = vmxor %vm832, %vm836
          %v838 = vsel %vm837, %v810, %v819
          %v839 = vsel %vm837, %v811, %v826
          %840 = xla_tuple %v838, %v839
          %841 = vst [vmem:[#allocation10] sm:$0xff] %v838
          %842 = vst [vmem:[#allocation12] sm:$0xff] %v839
          %843 = xla_tuple %841, %842
          %844 = xla_tuple [#allocation11], [#allocation13]
          %v845 = vld [vmem:[#allocation11] sm:$0xff]
          %v846 = vld [vmem:[#allocation13] sm:$0xff]
          %847 = xla_tuple %v845, %v846
          %v849 = vunpack.c.l.s4 839939668
          %v850 = vunpack.c.0.s8 %v849
          %v851 = vlaneseq
          %v852 = vshrl.u32 %v851, 7
          %v853 = vsub.s32 %v850, %v852
          %v854 = vrot.slane %v845, %v853
          %v856 = vunpack.c.l.s4 839939668
          %v857 = vunpack.c.0.s8 %v856
          %v858 = vlaneseq
          %v859 = vshrl.u32 %v858, 7
          %v860 = vsub.s32 %v857, %v859
          %v861 = vrot.slane %v846, %v860
          %862 = xla_tuple %v854, %v861
          %vm863 = vcmp.gt.s32.totalorder %v845, %v854
          %vm864 = vcmp.eq.s32.totalorder %v845, %v854
          %vm865 = vcmp.lt.s32.totalorder %v846, %v861
          %vm866 = vmand %vm864, %vm865
          %vm867 = vmor %vm863, %vm866
          %v868 = vlaneseq
          %v869 = vshrl.u32 %v868, 7
          %v870 = vand.u32 %v869, 4
          %vm871 = vcmp.ne.s32.totalorder %v870, 0
          %vm872 = vmxor %vm867, %vm871
          %v873 = vsel %vm872, %v845, %v854
          %v874 = vsel %vm872, %v846, %v861
          %875 = xla_tuple %v873, %v874
          %v877 = vunpack.c.l.s4 1417023538
          %v878 = vunpack.c.0.s8 %v877
          %v879 = vlaneseq
          %v880 = vshrl.u32 %v879, 7
          %v881 = vsub.s32 %v878, %v880
          %v882 = vrot.slane %v873, %v881
          %v884 = vunpack.c.l.s4 1417023538
          %v885 = vunpack.c.0.s8 %v884
          %v886 = vlaneseq
          %v887 = vshrl.u32 %v886, 7
          %v888 = vsub.s32 %v885, %v887
          %v889 = vrot.slane %v874, %v888
          %890 = xla_tuple %v882, %v889
          %vm891 = vcmp.gt.s32.totalorder %v873, %v882
          %vm892 = vcmp.eq.s32.totalorder %v873, %v882
          %vm893 = vcmp.lt.s32.totalorder %v874, %v889
          %vm894 = vmand %vm892, %vm893
          %vm895 = vmor %vm891, %vm894
          %v896 = vlaneseq
          %v897 = vshrl.u32 %v896, 7
          %v898 = vand.u32 %v897, 2
          %vm899 = vcmp.ne.s32.totalorder %v898, 0
          %vm900 = vmxor %vm895, %vm899
          %v901 = vsel %vm900, %v873, %v882
          %v902 = vsel %vm900, %v874, %v889
          %903 = xla_tuple %v901, %v902
          %v905 = vunpack.c.l.s4 1732584193
          %v906 = vunpack.c.0.s8 %v905
          %v907 = vlaneseq
          %v908 = vshrl.u32 %v907, 7
          %v909 = vsub.s32 %v906, %v908
          %v910 = vrot.slane %v901, %v909
          %v912 = vunpack.c.l.s4 1732584193
          %v913 = vunpack.c.0.s8 %v912
          %v914 = vlaneseq
          %v915 = vshrl.u32 %v914, 7
          %v916 = vsub.s32 %v913, %v915
          %v917 = vrot.slane %v902, %v916
          %918 = xla_tuple %v910, %v917
          %vm919 = vcmp.gt.s32.totalorder %v901, %v910
          %vm920 = vcmp.eq.s32.totalorder %v901, %v910
          %vm921 = vcmp.lt.s32.totalorder %v902, %v917
          %vm922 = vmand %vm920, %vm921
          %vm923 = vmor %vm919, %vm922
          %v924 = vlaneseq
          %v925 = vshrl.u32 %v924, 7
          %v926 = vand.u32 %v925, 1
          %vm927 = vcmp.ne.s32.totalorder %v926, 0
          %vm928 = vmxor %vm923, %vm927
          %v929 = vsel %vm928, %v901, %v910
          %v930 = vsel %vm928, %v902, %v917
          %931 = xla_tuple %v929, %v930
          %932 = vst [vmem:[#allocation11] sm:$0xff] %v929
          %933 = vst [vmem:[#allocation13] sm:$0xff] %v930
          %934 = xla_tuple %932, %933
          %v935 = vld [vmem:[#allocation11] sm:$0xff]
          %v936 = vld [vmem:[#allocation13] sm:$0xff]
          %937 = xla_tuple %v935, %v936
          %v939 = vunpack.c.l.s4 839939668
          %v940 = vunpack.c.0.s8 %v939
          %v941 = vlaneseq
          %v942 = vshrl.u32 %v941, 7
          %v943 = vsub.s32 %v940, %v942
          %v944 = vrot.slane %v935, %v943
          %v946 = vunpack.c.l.s4 839939668
          %v947 = vunpack.c.0.s8 %v946
          %v948 = vlaneseq
          %v949 = vshrl.u32 %v948, 7
          %v950 = vsub.s32 %v947, %v949
          %v951 = vrot.slane %v936, %v950
          %952 = xla_tuple %v944, %v951
          %vm953 = vcmp.gt.s32.totalorder %v935, %v944
          %vm954 = vcmp.eq.s32.totalorder %v935, %v944
          %vm955 = vcmp.lt.s32.totalorder %v936, %v951
          %vm956 = vmand %vm954, %vm955
          %vm957 = vmor %vm953, %vm956
          %v958 = vlaneseq
          %v959 = vshrl.u32 %v958, 7
          %v960 = vand.u32 %v959, 4
          %vm961 = vcmp.ne.s32.totalorder %v960, 0
          %vm962 = vmxor %vm957, %vm961
          %v963 = vsel %vm962, %v935, %v944
          %v964 = vsel %vm962, %v936, %v951
          %965 = xla_tuple %v963, %v964
          %v967 = vunpack.c.l.s4 1417023538
          %v968 = vunpack.c.0.s8 %v967
          %v969 = vlaneseq
          %v970 = vshrl.u32 %v969, 7
          %v971 = vsub.s32 %v968, %v970
          %v972 = vrot.slane %v963, %v971
          %v974 = vunpack.c.l.s4 1417023538
          %v975 = vunpack.c.0.s8 %v974
          %v976 = vlaneseq
          %v977 = vshrl.u32 %v976, 7
          %v978 = vsub.s32 %v975, %v977
          %v979 = vrot.slane %v964, %v978
          %980 = xla_tuple %v972, %v979
          %vm981 = vcmp.gt.s32.totalorder %v963, %v972
          %vm982 = vcmp.eq.s32.totalorder %v963, %v972
          %vm983 = vcmp.lt.s32.totalorder %v964, %v979
          %vm984 = vmand %vm982, %vm983
          %vm985 = vmor %vm981, %vm984
          %v986 = vlaneseq
          %v987 = vshrl.u32 %v986, 7
          %v988 = vand.u32 %v987, 2
          %vm989 = vcmp.ne.s32.totalorder %v988, 0
          %vm990 = vmxor %vm985, %vm989
          %v991 = vsel %vm990, %v963, %v972
          %v992 = vsel %vm990, %v964, %v979
          %993 = xla_tuple %v991, %v992
          %v995 = vunpack.c.l.s4 1732584193
          %v996 = vunpack.c.0.s8 %v995
          %v997 = vlaneseq
          %v998 = vshrl.u32 %v997, 7
          %v999 = vsub.s32 %v996, %v998
          %v1000 = vrot.slane %v991, %v999
          %v1002 = vunpack.c.l.s4 1732584193
          %v1003 = vunpack.c.0.s8 %v1002
          %v1004 = vlaneseq
          %v1005 = vshrl.u32 %v1004, 7
          %v1006 = vsub.s32 %v1003, %v1005
          %v1007 = vrot.slane %v992, %v1006
          %1008 = xla_tuple %v1000, %v1007
          %vm1009 = vcmp.gt.s32.totalorder %v991, %v1000
          %vm1010 = vcmp.eq.s32.totalorder %v991, %v1000
          %vm1011 = vcmp.lt.s32.totalorder %v992, %v1007
          %vm1012 = vmand %vm1010, %vm1011
          %vm1013 = vmor %vm1009, %vm1012
          %v1014 = vlaneseq
          %v1015 = vshrl.u32 %v1014, 7
          %v1016 = vand.u32 %v1015, 1
          %vm1017 = vcmp.ne.s32.totalorder %v1016, 0
          %vm1018 = vmxor %vm1013, %vm1017
          %v1019 = vsel %vm1018, %v991, %v1000
          %v1020 = vsel %vm1018, %v992, %v1007
          %1021 = xla_tuple %v1019, %v1020
          %1022 = vst [vmem:[#allocation11] sm:$0xff] %v1019
          %1023 = vst [vmem:[#allocation13] sm:$0xff] %v1020
          %1024 = xla_tuple %1022, %1023
        %v1025 = vld [vmem:[#allocation10] sm:$0xff]
        %vm1026 = vcmp.lt.s32.totalorder %v1025, 0
        %v1027 = vsub.s32 2147483647, %v1025
        %v1028 = vsel %vm1026, %v1027, %v1025
        %1029 = vst [vmem:[#allocation10] sm:$0xff] %v1028
        %v1030 = vld [vmem:[#allocation10] sm:$0xff]
        %1031 = vxpose.xlu0.b32.start.end [1/1] (short) %v1030, 128
        %v1032 = vpop.trf.xlu0
        %v1033 = vpop.trf.xlu0
        %v1034 = vpop.trf.xlu0
        %v1035 = vpop.trf.xlu0
        %v1036 = vpop.trf.xlu0
        %v1037 = vpop.trf.xlu0
        %v1038 = vpop.trf.xlu0
        %v1039 = vpop.trf.xlu0
        %v1040 = vpop.trf.xlu0
        %v1041 = vpop.trf.xlu0
        %v1042 = vpop.trf.xlu0
        %v1043 = vpop.trf.xlu0
        %v1044 = vpop.trf.xlu0
        %v1045 = vpop.trf.xlu0
        %v1046 = vpop.trf.xlu0
        %v1047 = vpop.trf.xlu0
        %1048 = vst [vmem:[%s34] sm:$0xff] %v1032
        %v1049 = vld [vmem:[#allocation12] sm:$0xff]
        %1050 = vxpose.xlu0.b32.start.end [1/1] (short) %v1049, 128
        %v1051 = vpop.trf.xlu0
        %v1052 = vpop.trf.xlu0
        %v1053 = vpop.trf.xlu0
        %v1054 = vpop.trf.xlu0
        %v1055 = vpop.trf.xlu0
        %v1056 = vpop.trf.xlu0
        %v1057 = vpop.trf.xlu0
        %v1058 = vpop.trf.xlu0
        %v1059 = vpop.trf.xlu0
        %v1060 = vpop.trf.xlu0
        %v1061 = vpop.trf.xlu0
        %v1062 = vpop.trf.xlu0
        %v1063 = vpop.trf.xlu0
        %v1064 = vpop.trf.xlu0
        %v1065 = vpop.trf.xlu0
        %v1066 = vpop.trf.xlu0
        %1067 = vst [vmem:[%s38] sm:$0xff] %v1051
        %s1068 = sand.u32 %s9, 1
        %s1069 = scalar_lea.sflag [#allocation8], %s1068
        %s1070 = sand.u32 %s9, 1
        %s1071 = smul.addr %s1070, 8
        %s1072 = scalar_lea.vmem [#allocation7], %s1071
        %s1073 = sand.u32 %s9, 1
        %s1074 = sand.u32 %s9, 1
        %s1075 = smul.addr %s1074, 8
        %s1076 = scalar_lea.vmem [#allocation9], %s1075
        %s1078 = ssub.s32 128, 128
        %1079 = vsyncadd %s1069, %s1078
        %s1080 = sadd.s32 %s16, %s15
        %s1081 = smul.addr %s1080, 128
        %s1082 = scalar_lea.hbm %s1, %s1081
        %s1084 = sshll.u32 %s1072, 4
        %s1085 = int_to_ptr.vmem [resolvable:$true] %s1084
        %1087 = dma.vmem_to_hbm [thread:$0]  %s1085, 128, %s1082, %s1069
        %s1088 = sadd.s32 %s16, %s15
        %s1089 = smul.addr %s1088, 8
        %s1090 = scalar_lea.vmem %s2, %s1089
        // Predicated region
        $region63: #{custom-call} parent=11 // pred_check
          _
        $region64: #{custom-call} parent=11 // pred_check_branch
          %1092 = sbr.rel (0) target = $region66
        $region65: #{custom-call} parent=11 // pred_region
          // Predicated region
          $region67: #{custom-call} parent=65 // pred_check
            _
          $region68: #{custom-call} parent=65 // pred_check_branch
            %1094 = sbr.rel (0) target = $region70
          $region69: #{custom-call} parent=65 // pred_region
            // Predicated region
            $region82: #{custom-call} parent=69 // pred_check
              _
            $region83: #{custom-call} parent=69 // pred_check_branch
              %1110 = sbr.rel (0) target = $region85
            $region84: #{custom-call} parent=69 // pred_region
              loop: start=0, step=1, limit=1
              $region86: #{custom-call} parent=84 // loop_pre_header
                _
              $region87: #{custom-call} parent=84 // loop_header
                %s1112 = sphi 0, %s1116
                %p1113 = scmp.ge.s32.totalorder %s1112, 1
                %s1117 = sphi %s1076, %s1076
                %s1118 = sphi %s1090, %s1090
              $region88: #{custom-call} parent=84 // loop_header_branch
                %1115 = sbr.rel (%p1113) target = $region92
              $region89: #{custom-call} parent=84 // loop_body
                %v1119 = vld [vmem:[%s1117] sm:$0xff]
                %1120 = vst [vmem:[%s1118] sm:$0xff] %v1119
              $region90: #{custom-call} parent=84 // loop_footer
                %s1116 = sadd.s32 1, %s1112
              $region91: #{custom-call} parent=84 // loop_footer_branch
                %1111 = sbr.rel target = $region87
              $region92: #{custom-call} parent=84 // loop_exit
                _
            $region85: #{custom-call} parent=69 // pred_fallthru
              _
            // Predicated region
            $region93: #{custom-call} parent=69 // pred_check
              _
            $region94: #{custom-call} parent=69 // pred_check_branch
              %1122 = sbr.rel target = $region96
            $region95: #{custom-call} parent=69 // pred_region
              _
            $region96: #{custom-call} parent=69 // pred_fallthru
              _
          $region70: #{custom-call} parent=65 // pred_fallthru
            _
          // Predicated region
          $region71: #{custom-call} parent=65 // pred_check
            _
          $region72: #{custom-call} parent=65 // pred_check_branch
            %1096 = sbr.rel target = $region74
          $region73: #{custom-call} parent=65 // pred_region
            %s1098 = ssub.s32 256, 1
            loop: start=0, step=1, limit=1
            $region75: #{custom-call} parent=73 // loop_pre_header
              _
            $region76: #{custom-call} parent=73 // loop_header
              %s1100 = sphi 0, %s1104
              %p1101 = scmp.ge.s32.totalorder %s1100, 1
              %s1105 = sphi %s1076, %s1076
              %s1106 = sphi %s1090, %s1090
            $region77: #{custom-call} parent=73 // loop_header_branch
              %1103 = sbr.rel (%p1101) target = $region81
            $region78: #{custom-call} parent=73 // loop_body
              %v1107 = vld [vmem:[%s1105] sm:%s1098]
              %1108 = vst [vmem:[%s1106] sm:%s1098] %v1107
            $region79: #{custom-call} parent=73 // loop_footer
              %s1104 = sadd.s32 1, %s1100
            $region80: #{custom-call} parent=73 // loop_footer_branch
              %1099 = sbr.rel target = $region76
            $region81: #{custom-call} parent=73 // loop_exit
              _
          $region74: #{custom-call} parent=65 // pred_fallthru
            _
        $region66: #{custom-call} parent=11 // pred_fallthru
          _
        %1123 = vnop
      $region12: #{custom-call} parent=5 // pred_fallthru
        _
      %p1124 = scmp.le.s32.totalorder 1, %s9
      // Predicated region
      $region97: #{custom-call} parent=5 // pred_check
        %p1125 = pneg %p1124
      $region98: #{custom-call} parent=5 // pred_check_branch
        %1127 = sbr.rel (%p1125) target = $region100
      $region99: #{custom-call} parent=5 // pred_region
        %s1128 = ssub.s32 %s9, 1
        %s1129 = sand.u32 %s14, 1
        %s1130 = scalar_lea.sflag [#allocation8], %s1129
        %s1131 = sand.u32 %s14, 1
        %s1132 = smul.addr %s1131, 8
        %s1133 = scalar_lea.vmem [#allocation7], %s1132
        %1134 = dma.done %s1130, 128
        %s1135 = sand.u32 %s14, 1
        %s1136 = sand.u32 %s14, 1
        %s1137 = smul.addr %s1136, 8
        %s1138 = scalar_lea.vmem [#allocation9], %s1137
      $region100: #{custom-call} parent=5 // pred_fallthru
        _
    $region6: #{custom-call} parent=1 // loop_footer
      %s13 = sadd.s32 1, %s9
    $region7: #{custom-call} parent=1 // loop_footer_branch
      %8 = sbr.rel target = $region3
    $region8: #{custom-call} parent=1 // loop_exit
      _
    %1139 = vsyncpa [#allocation8], 1
    %s1140 = scalar_lea.sflag [#allocation8], 1
    %1141 = vsyncpa %s1140, 1

// kernel: _similarity_topk.1
$region0: #{_similarity_topk.1}
  #allocation0 [shape = 'u32[]', space=smem, size = 0x4, offset = 0x4, fixed_abs, tag = 'smem constant byte address 0x4 - core index']
  #allocation1 [shape = 'u32[144,128]{1,0:T(1,128)}', space=vmem, size = 0x12000, scoped, tag = 'internal scratch']
  %s0 = inlined_call_operand.hbm [shape: f32[128,128], index: 0, kind: input, shape index: {}]
  %s1 = inlined_call_operand.hbm [shape: f32[128,128], index: 1, kind: input, shape index: {}]
  %s2 = inlined_call_operand.vmem [shape: f32[1,128], index: 2, kind: input, shape index: {}]
  %s3 = inlined_call_operand.vmem [shape: f32[128,128], index: 3, kind: output, shape index: {}]
  %s4 = sld [smem:[#allocation0]]
  $region30: #{_similarity_topk.1} parent=0
    _
  %s6 = ssub.s32 1, %s4
  %s7 = scalar_select 0, %s6, %s4
  $region1: #{_similarity_topk.1} parent=0
    #allocation2 [shape = 'u8[65536]{0}', space=vmem, size = 0x10000, scoped, tag = 'input window, operand 0, single buffered']
    #allocation3 [shape = 's32[1]{0}', space=sflag, size = 0x4, scoped, tag = 'scoped memory for _similarity_topk.1']
    #allocation4 [shape = 'u8[65536]{0}', space=vmem, size = 0x10000, scoped, tag = 'input window, operand 1, single buffered']
    #allocation5 [shape = 's32[1]{0}', space=sflag, size = 0x4, scoped, tag = 'scoped memory for _similarity_topk.1']
    %8 = vsyncpa [#allocation3], 0
    %9 = vsyncpa [#allocation5], 0
    // Predicated region
    $region2: #{_similarity_topk.1} parent=1 // pred_check
      _
    $region3: #{_similarity_topk.1} parent=1 // pred_check_branch
      %11 = sbr.rel (0) target = $region5
    $region4: #{_similarity_topk.1} parent=1 // pred_region
      %s13 = ssub.s32 2048, 2048
      %14 = vsyncadd [#allocation3], %s13
      %s15 = sshll.u32 [#allocation2], 4
      %s16 = int_to_ptr.vmem [resolvable:$true] %s15
      %21 = dma.hbm_to_vmem [thread:$0]  %s0, 2048, %s16, [#allocation3], 128, 128, 8
    $region5: #{_similarity_topk.1} parent=1 // pred_fallthru
      _
    // Predicated region
    $region6: #{_similarity_topk.1} parent=1 // pred_check
      _
    $region7: #{_similarity_topk.1} parent=1 // pred_check_branch
      %23 = sbr.rel (0) target = $region9
    $region8: #{_similarity_topk.1} parent=1 // pred_region
      %s25 = ssub.s32 2048, 2048
      %26 = vsyncadd [#allocation5], %s25
      %s27 = sshll.u32 [#allocation4], 4
      %s28 = int_to_ptr.vmem [resolvable:$true] %s27
      %33 = dma.hbm_to_vmem [thread:$0]  %s1, 2048, %s28, [#allocation5], 128, 128, 8
    $region9: #{_similarity_topk.1} parent=1 // pred_fallthru
      _
    // Predicated region
    $region10: #{_similarity_topk.1} parent=1 // pred_check
      _
    $region11: #{_similarity_topk.1} parent=1 // pred_check_branch
      %35 = sbr.rel (0) target = $region13
    $region12: #{_similarity_topk.1} parent=1 // pred_region
      _
    $region13: #{_similarity_topk.1} parent=1 // pred_fallthru
      _
    // Predicated region
    $region14: #{_similarity_topk.1} parent=1 // pred_check
      _
    $region15: #{_similarity_topk.1} parent=1 // pred_check_branch
      %37 = sbr.rel (0) target = $region17
    $region16: #{_similarity_topk.1} parent=1 // pred_region
      %38 = dma.done [#allocation3], 2048
    $region17: #{_similarity_topk.1} parent=1 // pred_fallthru
      _
    // Predicated region
    $region18: #{_similarity_topk.1} parent=1 // pred_check
      _
    $region19: #{_similarity_topk.1} parent=1 // pred_check_branch
      %40 = sbr.rel (0) target = $region21
    $region20: #{_similarity_topk.1} parent=1 // pred_region
      %41 = dma.done [#allocation5], 2048
    $region21: #{_similarity_topk.1} parent=1 // pred_fallthru
      _
    %v42 = vld [vmem:[#allocation2] sm:$0xff]
    %v43 = vld [vmem:[#allocation2 + $0x8] sm:$0xff]
    %v44 = vld [vmem:[#allocation2 + $0x10] sm:$0xff]
    %v45 = vld [vmem:[#allocation2 + $0x18] sm:$0xff]
    %v46 = vld [vmem:[#allocation2 + $0x20] sm:$0xff]
    %v47 = vld [vmem:[#allocation2 + $0x28] sm:$0xff]
    %v48 = vld [vmem:[#allocation2 + $0x30] sm:$0xff]
    %v49 = vld [vmem:[#allocation2 + $0x38] sm:$0xff]
    %v50 = vld [vmem:[#allocation2 + $0x40] sm:$0xff]
    %v51 = vld [vmem:[#allocation2 + $0x48] sm:$0xff]
    %v52 = vld [vmem:[#allocation2 + $0x50] sm:$0xff]
    %v53 = vld [vmem:[#allocation2 + $0x58] sm:$0xff]
    %v54 = vld [vmem:[#allocation2 + $0x60] sm:$0xff]
    %v55 = vld [vmem:[#allocation2 + $0x68] sm:$0xff]
    %v56 = vld [vmem:[#allocation2 + $0x70] sm:$0xff]
    %v57 = vld [vmem:[#allocation2 + $0x78] sm:$0xff]
    %v58 = vld [vmem:[#allocation4] sm:$0xff]
    %v59 = vld [vmem:[#allocation4 + $0x8] sm:$0xff]
    %v60 = vld [vmem:[#allocation4 + $0x10] sm:$0xff]
    %v61 = vld [vmem:[#allocation4 + $0x18] sm:$0xff]
    %v62 = vld [vmem:[#allocation4 + $0x20] sm:$0xff]
    %v63 = vld [vmem:[#allocation4 + $0x28] sm:$0xff]
    %v64 = vld [vmem:[#allocation4 + $0x30] sm:$0xff]
    %v65 = vld [vmem:[#allocation4 + $0x38] sm:$0xff]
    %v66 = vld [vmem:[#allocation4 + $0x40] sm:$0xff]
    %v67 = vld [vmem:[#allocation4 + $0x48] sm:$0xff]
    %v68 = vld [vmem:[#allocation4 + $0x50] sm:$0xff]
    %v69 = vld [vmem:[#allocation4 + $0x58] sm:$0xff]
    %v70 = vld [vmem:[#allocation4 + $0x60] sm:$0xff]
    %v71 = vld [vmem:[#allocation4 + $0x68] sm:$0xff]
    %v72 = vld [vmem:[#allocation4 + $0x70] sm:$0xff]
    %v73 = vld [vmem:[#allocation4 + $0x78] sm:$0xff]
    %74 = vmatprep.subr.mxu0 0.0
    %75 = vmatpush1.msra.mxu0 %v73
    %76 = vmatprep.subr.mxu0 0.0
    %77 = vmatpush1.msra.mxu0 %v72
    %78 = vmatprep.subr.mxu0 0.0
    %79 = vmatpush1.msra.mxu0 %v71
    %80 = vmatprep.subr.mxu0 0.0
    %81 = vmatpush1.msra.mxu0 %v70
    %82 = vmatprep.subr.mxu0 0.0
    %83 = vmatpush1.msra.mxu0 %v69
    %84 = vmatprep.subr.mxu0 0.0
    %85 = vmatpush1.msra.mxu0 %v68
    %86 = vmatprep.subr.mxu0 0.0
    %87 = vmatpush1.msra.mxu0 %v67
    %88 = vmatprep.subr.mxu0 0.0
    %89 = vmatpush1.msra.mxu0 %v66
    %90 = vmatprep.subr.mxu0 0.0
    %91 = vmatpush1.msra.mxu0 %v65
    %92 = vmatprep.subr.mxu0 0.0
    %93 = vmatpush1.msra.mxu0 %v64
    %94 = vmatprep.subr.mxu0 0.0
    %95 = vmatpush1.msra.mxu0 %v63
    %96 = vmatprep.subr.mxu0 0.0
    %97 = vmatpush1.msra.mxu0 %v62
    %98 = vmatprep.subr.mxu0 0.0
    %99 = vmatpush1.msra.mxu0 %v61
    %100 = vmatprep.subr.mxu0 0.0
    %101 = vmatpush1.msra.mxu0 %v60
    %102 = vmatprep.subr.mxu0 0.0
    %103 = vmatpush1.msra.mxu0 %v59
    %104 = vmatprep.subr.mxu0 0.0
    %105 = vmatpush1.msra.mxu0 %v58
    %106 = vmatprep.subr.mxu0 0.0
    %107 = vmatpush2.msra.mxu0 0.0
    %108 = vmatprep.subr.mxu0 0.0
    %109 = vmatpush2.msra.mxu0 0.0
    %110 = vmatprep.subr.mxu0 0.0
    %111 = vmatpush2.msra.mxu0 0.0
    %112 = vmatprep.subr.mxu0 0.0
    %113 = vmatpush2.msra.mxu0 0.0
    %114 = vmatprep.subr.mxu0 0.0
    %115 = vmatpush2.msra.mxu0 0.0
    %116 = vmatprep.subr.mxu0 0.0
    %117 = vmatpush2.msra.mxu0 0.0
    %118 = vmatprep.subr.mxu0 0.0
    %119 = vmatpush2.msra.mxu0 0.0
    %120 = vmatprep.subr.mxu0 0.0
    %121 = vmatpush2.msra.mxu0 0.0
    %122 = vmatprep.subr.mxu0 0.0
    %123 = vmatpush2.msra.mxu0 0.0
    %124 = vmatprep.subr.mxu0 0.0
    %125 = vmatpush2.msra.mxu0 0.0
    %126 = vmatprep.subr.mxu0 0.0
    %127 = vmatpush2.msra.mxu0 0.0
    %128 = vmatprep.subr.mxu0 0.0
    %129 = vmatpush2.msra.mxu0 0.0
    %130 = vmatprep.subr.mxu0 0.0
    %131 = vmatpush2.msra.mxu0 0.0
    %132 = vmatprep.subr.mxu0 0.0
    %133 = vmatpush2.msra.mxu0 0.0
    %134 = vmatprep.subr.mxu0 0.0
    %135 = vmatpush2.msra.mxu0 0.0
    %136 = vmatprep.subr.mxu0 0.0
    %137 = vmatpush2.msra.mxu0 0.0
    %138 = vmatprep.mubr.f32.mxu0 0.0
    %139 = vmatmul.mubr.f32.gmra.mxu0 %v42
    %v140 = vpop.f32.mrf.mxu0
    %v141 = vadd.f32 0.0, %v140
    %v142 = vpop.f32.mrf.mxu0
    %143 = vmatprep.mubr.f32.mxu0 0.0
    %144 = vmatmul.mubr.f32.gmra.mxu0 %v43
    %v145 = vpop.f32.mrf.mxu0
    %v146 = vadd.f32 0.0, %v145
    %v147 = vpop.f32.mrf.mxu0
    %148 = vmatprep.mubr.f32.mxu0 0.0
    %149 = vmatmul.mubr.f32.gmra.mxu0 %v44
    %v150 = vpop.f32.mrf.mxu0
    %v151 = vadd.f32 0.0, %v150
    %v152 = vpop.f32.mrf.mxu0
    %153 = vmatprep.mubr.f32.mxu0 0.0
    %154 = vmatmul.mubr.f32.gmra.mxu0 %v45
    %v155 = vpop.f32.mrf.mxu0
    %v156 = vadd.f32 0.0, %v155
    %v157 = vpop.f32.mrf.mxu0
    %158 = vmatprep.mubr.f32.mxu0 0.0
    %159 = vmatmul.mubr.f32.gmra.mxu0 %v46
    %v160 = vpop.f32.mrf.mxu0
    %v161 = vadd.f32 0.0, %v160
    %v162 = vpop.f32.mrf.mxu0
    %163 = vmatprep.mubr.f32.mxu0 0.0
    %164 = vmatmul.mubr.f32.gmra.mxu0 %v47
    %v165 = vpop.f32.mrf.mxu0
    %v166 = vadd.f32 0.0, %v165
    %v167 = vpop.f32.mrf.mxu0
    %168 = vmatprep.mubr.f32.mxu0 0.0
    %169 = vmatmul.mubr.f32.gmra.mxu0 %v48
    %v170 = vpop.f32.mrf.mxu0
    %v171 = vadd.f32 0.0, %v170
    %v172 = vpop.f32.mrf.mxu0
    %173 = vmatprep.mubr.f32.mxu0 0.0
    %174 = vmatmul.mubr.f32.gmra.mxu0 %v49
    %v175 = vpop.f32.mrf.mxu0
    %v176 = vadd.f32 0.0, %v175
    %v177 = vpop.f32.mrf.mxu0
    %178 = vmatprep.mubr.f32.mxu0 0.0
    %179 = vmatmul.mubr.f32.gmra.mxu0 %v50
    %v180 = vpop.f32.mrf.mxu0
    %v181 = vadd.f32 0.0, %v180
    %v182 = vpop.f32.mrf.mxu0
    %183 = vmatprep.mubr.f32.mxu0 0.0
    %184 = vmatmul.mubr.f32.gmra.mxu0 %v51
    %v185 = vpop.f32.mrf.mxu0
    %v186 = vadd.f32 0.0, %v185
    %v187 = vpop.f32.mrf.mxu0
    %188 = vmatprep.mubr.f32.mxu0 0.0
    %189 = vmatmul.mubr.f32.gmra.mxu0 %v52
    %v190 = vpop.f32.mrf.mxu0
    %v191 = vadd.f32 0.0, %v190
    %v192 = vpop.f32.mrf.mxu0
    %193 = vmatprep.mubr.f32.mxu0 0.0
    %194 = vmatmul.mubr.f32.gmra.mxu0 %v53
    %v195 = vpop.f32.mrf.mxu0
    %v196 = vadd.f32 0.0, %v195
    %v197 = vpop.f32.mrf.mxu0
    %198 = vmatprep.mubr.f32.mxu0 0.0
    %199 = vmatmul.mubr.f32.gmra.mxu0 %v54
    %v200 = vpop.f32.mrf.mxu0
    %v201 = vadd.f32 0.0, %v200
    %v202 = vpop.f32.mrf.mxu0
    %203 = vmatprep.mubr.f32.mxu0 0.0
    %204 = vmatmul.mubr.f32.gmra.mxu0 %v55
    %v205 = vpop.f32.mrf.mxu0
    %v206 = vadd.f32 0.0, %v205
    %v207 = vpop.f32.mrf.mxu0
    %208 = vmatprep.mubr.f32.mxu0 0.0
    %209 = vmatmul.mubr.f32.gmra.mxu0 %v56
    %v210 = vpop.f32.mrf.mxu0
    %v211 = vadd.f32 0.0, %v210
    %v212 = vpop.f32.mrf.mxu0
    %213 = vmatprep.mubr.f32.mxu0 0.0
    %214 = vmatmul.mubr.f32.gmra.mxu0 %v57
    %v215 = vpop.f32.mrf.mxu0
    %v216 = vadd.f32 0.0, %v215
    %v217 = vpop.f32.mrf.mxu0
    %218 = vdwg.mxu0
    %219 = vmatprep.subr.mxu0 0.0
    %220 = vmatpush1.xpose.msra.mxu0 %v216
    %221 = vmatprep.subr.mxu0 0.0
    %222 = vmatpush1.xpose.msra.mxu0 %v211
    %223 = vmatprep.subr.mxu0 0.0
    %224 = vmatpush1.xpose.msra.mxu0 %v206
    %225 = vmatprep.subr.mxu0 0.0
    %226 = vmatpush1.xpose.msra.mxu0 %v201
    %227 = vmatprep.subr.mxu0 0.0
    %228 = vmatpush1.xpose.msra.mxu0 %v196
    %229 = vmatprep.subr.mxu0 0.0
    %230 = vmatpush1.xpose.msra.mxu0 %v191
    %231 = vmatprep.subr.mxu0 0.0
    %232 = vmatpush1.xpose.msra.mxu0 %v186
    %233 = vmatprep.subr.mxu0 0.0
    %234 = vmatpush1.xpose.msra.mxu0 %v181
    %235 = vmatprep.subr.mxu0 0.0
    %236 = vmatpush1.xpose.msra.mxu0 %v176
    %237 = vmatprep.subr.mxu0 0.0
    %238 = vmatpush1.xpose.msra.mxu0 %v171
    %239 = vmatprep.subr.mxu0 0.0
    %240 = vmatpush1.xpose.msra.mxu0 %v166
    %241 = vmatprep.subr.mxu0 0.0
    %242 = vmatpush1.xpose.msra.mxu0 %v161
    %243 = vmatprep.subr.mxu0 0.0
    %244 = vmatpush1.xpose.msra.mxu0 %v156
    %245 = vmatprep.subr.mxu0 0.0
    %246 = vmatpush1.xpose.msra.mxu0 %v151
    %247 = vmatprep.subr.mxu0 0.0
    %248 = vmatpush1.xpose.msra.mxu0 %v146
    %249 = vmatprep.subr.mxu0 0.0
    %250 = vmatpush1.xpose.msra.mxu0 %v141
    %251 = vmatprep.subr.mxu0 0.0
    %252 = vmatpush2.xpose.msra.mxu0 0.0
    %253 = vmatprep.subr.mxu0 0.0
    %254 = vmatpush2.xpose.msra.mxu0 0.0
    %255 = vmatprep.subr.mxu0 0.0
    %256 = vmatpush2.xpose.msra.mxu0 0.0
    %257 = vmatprep.subr.mxu0 0.0
    %258 = vmatpush2.xpose.msra.mxu0 0.0
    %259 = vmatprep.subr.mxu0 0.0
    %260 = vmatpush2.xpose.msra.mxu0 0.0
    %261 = vmatprep.subr.mxu0 0.0
    %262 = vmatpush2.xpose.msra.mxu0 0.0
    %263 = vmatprep.subr.mxu0 0.0
    %264 = vmatpush2.xpose.msra.mxu0 0.0
    %265 = vmatprep.subr.mxu0 0.0
    %266 = vmatpush2.xpose.msra.mxu0 0.0
    %267 = vmatprep.subr.mxu0 0.0
    %268 = vmatpush2.xpose.msra.mxu0 0.0
    %269 = vmatprep.subr.mxu0 0.0
    %270 = vmatpush2.xpose.msra.mxu0 0.0
    %271 = vmatprep.subr.mxu0 0.0
    %272 = vmatpush2.xpose.msra.mxu0 0.0
    %273 = vmatprep.subr.mxu0 0.0
    %274 = vmatpush2.xpose.msra.mxu0 0.0
    %275 = vmatprep.subr.mxu0 0.0
    %276 = vmatpush2.xpose.msra.mxu0 0.0
    %277 = vmatprep.subr.mxu0 0.0
    %278 = vmatpush2.xpose.msra.mxu0 0.0
    %279 = vmatprep.subr.mxu0 0.0
    %280 = vmatpush2.xpose.msra.mxu0 0.0
    %281 = vmatprep.subr.mxu0 0.0
    %282 = vmatpush2.xpose.msra.mxu0 0.0
    %283 = vmatprep.mubr.f32.mxu0 0.0
    %284 = vmatmul.mubr.f32.gmra.mxu0 %v141
    %v285 = vpop.f32.mrf.mxu0
    %v286 = vadd.f32 0.0, %v285
    %v287 = vpop.f32.mrf.mxu0
    %288 = vmatprep.mubr.f32.mxu0 0.0
    %289 = vmatmul.mubr.f32.gmra.mxu0 %v146
    %v290 = vpop.f32.mrf.mxu0
    %v291 = vadd.f32 0.0, %v290
    %v292 = vpop.f32.mrf.mxu0
    %293 = vmatprep.mubr.f32.mxu0 0.0
    %294 = vmatmul.mubr.f32.gmra.mxu0 %v151
    %v295 = vpop.f32.mrf.mxu0
    %v296 = vadd.f32 0.0, %v295
    %v297 = vpop.f32.mrf.mxu0
    %298 = vmatprep.mubr.f32.mxu0 0.0
    %299 = vmatmul.mubr.f32.gmra.mxu0 %v156
    %v300 = vpop.f32.mrf.mxu0
    %v301 = vadd.f32 0.0, %v300
    %v302 = vpop.f32.mrf.mxu0
    %303 = vmatprep.mubr.f32.mxu0 0.0
    %304 = vmatmul.mubr.f32.gmra.mxu0 %v161
    %v305 = vpop.f32.mrf.mxu0
    %v306 = vadd.f32 0.0, %v305
    %v307 = vpop.f32.mrf.mxu0
    %308 = vmatprep.mubr.f32.mxu0 0.0
    %309 = vmatmul.mubr.f32.gmra.mxu0 %v166
    %v310 = vpop.f32.mrf.mxu0
    %v311 = vadd.f32 0.0, %v310
    %v312 = vpop.f32.mrf.mxu0
    %313 = vmatprep.mubr.f32.mxu0 0.0
    %314 = vmatmul.mubr.f32.gmra.mxu0 %v171
    %v315 = vpop.f32.mrf.mxu0
    %v316 = vadd.f32 0.0, %v315
    %v317 = vpop.f32.mrf.mxu0
    %318 = vmatprep.mubr.f32.mxu0 0.0
    %319 = vmatmul.mubr.f32.gmra.mxu0 %v176
    %v320 = vpop.f32.mrf.mxu0
    %v321 = vadd.f32 0.0, %v320
    %v322 = vpop.f32.mrf.mxu0
    %323 = vmatprep.mubr.f32.mxu0 0.0
    %324 = vmatmul.mubr.f32.gmra.mxu0 %v181
    %v325 = vpop.f32.mrf.mxu0
    %v326 = vadd.f32 0.0, %v325
    %v327 = vpop.f32.mrf.mxu0
    %328 = vmatprep.mubr.f32.mxu0 0.0
    %329 = vmatmul.mubr.f32.gmra.mxu0 %v186
    %v330 = vpop.f32.mrf.mxu0
    %v331 = vadd.f32 0.0, %v330
    %v332 = vpop.f32.mrf.mxu0
    %333 = vmatprep.mubr.f32.mxu0 0.0
    %334 = vmatmul.mubr.f32.gmra.mxu0 %v191
    %v335 = vpop.f32.mrf.mxu0
    %v336 = vadd.f32 0.0, %v335
    %v337 = vpop.f32.mrf.mxu0
    %338 = vmatprep.mubr.f32.mxu0 0.0
    %339 = vmatmul.mubr.f32.gmra.mxu0 %v196
    %v340 = vpop.f32.mrf.mxu0
    %v341 = vadd.f32 0.0, %v340
    %v342 = vpop.f32.mrf.mxu0
    %343 = vmatprep.mubr.f32.mxu0 0.0
    %344 = vmatmul.mubr.f32.gmra.mxu0 %v201
    %v345 = vpop.f32.mrf.mxu0
    %v346 = vadd.f32 0.0, %v345
    %v347 = vpop.f32.mrf.mxu0
    %348 = vmatprep.mubr.f32.mxu0 0.0
    %349 = vmatmul.mubr.f32.gmra.mxu0 %v206
    %v350 = vpop.f32.mrf.mxu0
    %v351 = vadd.f32 0.0, %v350
    %v352 = vpop.f32.mrf.mxu0
    %353 = vmatprep.mubr.f32.mxu0 0.0
    %354 = vmatmul.mubr.f32.gmra.mxu0 %v211
    %v355 = vpop.f32.mrf.mxu0
    %v356 = vadd.f32 0.0, %v355
    %v357 = vpop.f32.mrf.mxu0
    %358 = vmatprep.mubr.f32.mxu0 0.0
    %359 = vmatmul.mubr.f32.gmra.mxu0 %v216
    %v360 = vpop.f32.mrf.mxu0
    %v361 = vadd.f32 0.0, %v360
    %v362 = vpop.f32.mrf.mxu0
    %363 = vdwg.mxu0
    %v364 = vlaneseq
    %v365 = vshrl.u32 %v364, 7
    %v366 = vadd.s32 %v365, 8
    %v367 = vadd.s32 %v365, 16
    %v368 = vadd.s32 %v365, 24
    %v369 = vadd.s32 %v365, 32
    %v370 = vadd.s32 %v365, 40
    %v371 = vadd.s32 %v365, 48
    %v372 = vadd.s32 %v365, 56
    %v373 = vadd.s32 %v365, 64
    %v374 = vadd.s32 %v365, 72
    %v375 = vadd.s32 %v365, 80
    %v376 = vadd.s32 %v365, 88
    %v377 = vadd.s32 %v365, 96
    %v378 = vadd.s32 %v365, 104
    %v379 = vadd.s32 %v365, 112
    %v380 = vadd.s32 %v365, 120
    %v381 = vlaneseq
    %v382 = vand.u32 %v381, 127
    %vm383 = vcmp.eq.s32.totalorder %v365, %v382
    %vm384 = vcmp.eq.s32.totalorder %v366, %v382
    %vm385 = vcmp.eq.s32.totalorder %v367, %v382
    %vm386 = vcmp.eq.s32.totalorder %v368, %v382
    %vm387 = vcmp.eq.s32.totalorder %v369, %v382
    %vm388 = vcmp.eq.s32.totalorder %v370, %v382
    %vm389 = vcmp.eq.s32.totalorder %v371, %v382
    %vm390 = vcmp.eq.s32.totalorder %v372, %v382
    %vm391 = vcmp.eq.s32.totalorder %v373, %v382
    %vm392 = vcmp.eq.s32.totalorder %v374, %v382
    %vm393 = vcmp.eq.s32.totalorder %v375, %v382
    %vm394 = vcmp.eq.s32.totalorder %v376, %v382
    %vm395 = vcmp.eq.s32.totalorder %v377, %v382
    %vm396 = vcmp.eq.s32.totalorder %v378, %v382
    %vm397 = vcmp.eq.s32.totalorder %v379, %v382
    %vm398 = vcmp.eq.s32.totalorder %v380, %v382
    %v399 = vsub.f32 %v286, 1.0
    %v400 = vsub.f32 %v291, 1.0
    %v401 = vsub.f32 %v296, 1.0
    %v402 = vsub.f32 %v301, 1.0
    %v403 = vsub.f32 %v306, 1.0
    %v404 = vsub.f32 %v311, 1.0
    %v405 = vsub.f32 %v316, 1.0
    %v406 = vsub.f32 %v321, 1.0
    %v407 = vsub.f32 %v326, 1.0
    %v408 = vsub.f32 %v331, 1.0
    %v409 = vsub.f32 %v336, 1.0
    %v410 = vsub.f32 %v341, 1.0
    %v411 = vsub.f32 %v346, 1.0
    %v412 = vsub.f32 %v351, 1.0
    %v413 = vsub.f32 %v356, 1.0
    %v414 = vsub.f32 %v361, 1.0
    %v415 = vsel %vm383, %v399, %v286
    %v416 = vsel %vm384, %v400, %v291
    %v417 = vsel %vm385, %v401, %v296
    %v418 = vsel %vm386, %v402, %v301
    %v419 = vsel %vm387, %v403, %v306
    %v420 = vsel %vm388, %v404, %v311
    %v421 = vsel %vm389, %v405, %v316
    %v422 = vsel %vm390, %v406, %v321
    %v423 = vsel %vm391, %v407, %v326
    %v424 = vsel %vm392, %v408, %v331
    %v425 = vsel %vm393, %v409, %v336
    %v426 = vsel %vm394, %v410, %v341
    %v427 = vsel %vm395, %v411, %v346
    %v428 = vsel %vm396, %v412, %v351
    %v429 = vsel %vm397, %v413, %v356
    %v430 = vsel %vm398, %v414, %v361
    %v431 = vld [vmem:[%s2] sm:$0x1]
    %v433 = vlaneseq
    %v434 = vshrl.u32 %v433, 7
    %v435 = vsub.s32 0, %v434
    %v436 = vrot.slane %v431, %v435
    %v438 = vadd.f32 %v415, %v436
    %v439 = vadd.f32 %v416, %v436
    %v440 = vadd.f32 %v417, %v436
    %v441 = vadd.f32 %v418, %v436
    %v442 = vadd.f32 %v419, %v436
    %v443 = vadd.f32 %v420, %v436
    %v444 = vadd.f32 %v421, %v436
    %v445 = vadd.f32 %v422, %v436
    %v446 = vadd.f32 %v423, %v436
    %v447 = vadd.f32 %v424, %v436
    %v448 = vadd.f32 %v425, %v436
    %v449 = vadd.f32 %v426, %v436
    %v450 = vadd.f32 %v427, %v436
    %v451 = vadd.f32 %v428, %v436
    %v452 = vadd.f32 %v429, %v436
    %v453 = vadd.f32 %v430, %v436
    %454 = vst [vmem:[%s3] sm:$0xff] %v438
    %455 = vst [vmem:[%s3 + $0x8] sm:$0xff] %v439
    %456 = vst [vmem:[%s3 + $0x10] sm:$0xff] %v440
    %457 = vst [vmem:[%s3 + $0x18] sm:$0xff] %v441
    %458 = vst [vmem:[%s3 + $0x20] sm:$0xff] %v442
    %459 = vst [vmem:[%s3 + $0x28] sm:$0xff] %v443
    %460 = vst [vmem:[%s3 + $0x30] sm:$0xff] %v444
    %461 = vst [vmem:[%s3 + $0x38] sm:$0xff] %v445
    %462 = vst [vmem:[%s3 + $0x40] sm:$0xff] %v446
    %463 = vst [vmem:[%s3 + $0x48] sm:$0xff] %v447
    %464 = vst [vmem:[%s3 + $0x50] sm:$0xff] %v448
    %465 = vst [vmem:[%s3 + $0x58] sm:$0xff] %v449
    %466 = vst [vmem:[%s3 + $0x60] sm:$0xff] %v450
    %467 = vst [vmem:[%s3 + $0x68] sm:$0xff] %v451
    %468 = vst [vmem:[%s3 + $0x70] sm:$0xff] %v452
    %469 = vst [vmem:[%s3 + $0x78] sm:$0xff] %v453
    // Predicated region
    $region22: #{_similarity_topk.1} parent=1 // pred_check
      _
    $region23: #{_similarity_topk.1} parent=1 // pred_check_branch
      %471 = sbr.rel (0) target = $region25
    $region24: #{_similarity_topk.1} parent=1 // pred_region
      _
    $region25: #{_similarity_topk.1} parent=1 // pred_fallthru
      _
    // Predicated region
    $region26: #{_similarity_topk.1} parent=1 // pred_check
      _
    $region27: #{_similarity_topk.1} parent=1 // pred_check_branch
      %473 = sbr.rel (0) target = $region29
    $region28: #{_similarity_topk.1} parent=1 // pred_region
      _
    $region29: #{_similarity_topk.1} parent=1 // pred_fallthru
      _
    %474 = vsyncpa [#allocation3], 1
    %475 = vsyncpa [#allocation5], 1

</llo_original>
